<compile_context>
chip_gen: v7x
topology: tpu7x:2x2x1
jax: 0.10.0
libtpu: 0.0.40
codegen_flags: <defaults>
</compile_context>

<pallas_src>
import functools

import jax
import jax.numpy as jnp
from jax import lax
from jax.experimental import pallas as pl
from jax.experimental.pallas import tpu as pltpu

BN_EPS = 1e-5


# ---------------------------------------------------------------------------
# Fused kernel: [BN + pointwise 1x1] for q/k/v  +  multi-head attention  +  out-proj.
# One batch element per grid step; everything stays in lane-dense (tokens, C) layout.
# ---------------------------------------------------------------------------
def _fused_attention_kernel(yq_ref, yk_ref, yv_ref,
                            wq_ref, bq_ref, wk_ref, bk_ref, wv_ref, bv_ref,
                            mask_ref, pw_ref, pb_ref, o_ref, *, num_heads):
    f32 = jnp.float32
    yq = yq_ref[0]                      # (Nq, C) depthwise-conv output, channel-last
    yk = yk_ref[0]                      # (Nk, C)
    yv = yv_ref[0]                      # (Nk, C)

    # BN-folded pointwise 1x1 projections (attention scale already folded into wq/bq).
    q = jnp.dot(yq, wq_ref[...], preferred_element_type=f32) + bq_ref[...]   # (Nq, C)
    k = jnp.dot(yk, wk_ref[...], preferred_element_type=f32) + bk_ref[...]   # (Nk, C)
    v = jnp.dot(yv, wv_ref[...], preferred_element_type=f32) + bv_ref[...]   # (Nk, C)

    # Lane-dense multi-head attention via block-diagonal (masked) K / V:
    #   mask[h*Nk + j, c] = 1  iff channel c belongs to head h.
    mask = mask_ref[...]                                    # (num_heads*Nk, C)
    kp = jnp.concatenate([k] * num_heads, axis=0) * mask    # (num_heads*Nk, C)
    vp = jnp.concatenate([v] * num_heads, axis=0) * mask    # (num_heads*Nk, C)

    # Scores for all heads at once: s[i, h*Nk+j] = scale * <q_h[i], k_h[j]>  (fully lane-dense)
    s = lax.dot_general(q, kp, (((1,), (1,)), ((), ())),
                        preferred_element_type=f32)         # (Nq, num_heads*Nk)
    m = jnp.max(s, axis=-1, keepdims=True)                  # global row max (valid for every head)
    p = jnp.exp(s - m)                                      # (Nq, num_heads*Nk)

    # Per-head softmax denominators broadcast over each head's channels with one dense matmul;
    # normalization is deferred until after the P@V matmul (C-wide instead of h*Nk-wide).
    denom = jnp.dot(p, mask, preferred_element_type=f32)    # (Nq, C)
    pv = jnp.dot(p, vp, preferred_element_type=f32)         # (Nq, C) un-normalized, head-concat
    attn = pv / denom

    # Fused output projection; single full-width lane-dense store.
    out = jnp.dot(attn, pw_ref[...], preferred_element_type=f32) + pb_ref[...]
    o_ref[0] = out.astype(o_ref.dtype)


def fused_attention(yq, yk, yv, pp, *, num_heads):
    """yq: (B, Nq, C); yk/yv: (B, Nk, C) depthwise-conv outputs -> (B, Nq, C)."""
    B, Nq, C = yq.shape
    Nk = yk.shape[1]
    kernel = functools.partial(_fused_attention_kernel, num_heads=num_heads)
    rep2d = lambda b: (0, 0)   # weights / biases / head mask are replicated across the batch grid
    return pl.pallas_call(
        kernel,
        out_shape=jax.ShapeDtypeStruct((B, Nq, C), yq.dtype),
        grid=(B,),
        in_specs=[
            pl.BlockSpec((1, Nq, C), lambda b: (b, 0, 0)),
            pl.BlockSpec((1, Nk, C), lambda b: (b, 0, 0)),
            pl.BlockSpec((1, Nk, C), lambda b: (b, 0, 0)),
            pl.BlockSpec((C, C), rep2d),                    # wq (scale folded in)
            pl.BlockSpec((1, C), rep2d),                    # bq
            pl.BlockSpec((C, C), rep2d),                    # wk
            pl.BlockSpec((1, C), rep2d),                    # bk
            pl.BlockSpec((C, C), rep2d),                    # wv
            pl.BlockSpec((1, C), rep2d),                    # bv
            pl.BlockSpec((num_heads * Nk, C), rep2d),       # head mask
            pl.BlockSpec((C, C), rep2d),                    # proj_w
            pl.BlockSpec((1, C), rep2d),                    # proj_b
        ],
        out_specs=pl.BlockSpec((1, Nq, C), lambda b: (b, 0, 0)),
        compiler_params=pltpu.CompilerParams(dimension_semantics=("parallel",)),
    )(yq, yk, yv,
      pp["q_w"], pp["q_b"], pp["k_w"], pp["k_b"], pp["v_w"], pp["v_b"],
      pp["head_mask"], pp["proj_w"], pp["proj_b"])


# ---------------------------------------------------------------------------
# Depthwise 3x3 conv in NHWC (XLA) — only the spatial stencil stays outside Pallas.
# ---------------------------------------------------------------------------
def _depthwise_conv_nhwc(x, w_hwio, b, stride, pad):
    # x: (B, H, W, C); w_hwio: (kh, kw, 1, C); grouped conv with groups = C.
    C = x.shape[-1]
    y = lax.conv_general_dilated(
        x, w_hwio, window_strides=(stride, stride),
        padding=[(pad, pad), (pad, pad)],
        dimension_numbers=("NHWC", "HWIO", "NHWC"),
        feature_group_count=C,
        precision=lax.Precision.HIGHEST)   # explicit & local (no global precision config)
    return y + b


# ---------------------------------------------------------------------------
# One-time parameter preparation (outside jit): HWIO depthwise weights, BN folded into the
# pointwise 1x1 weights, attention scale folded into the q projection, head block mask.
# ---------------------------------------------------------------------------
def prepare_params(params, *, num_heads, H, W, pad=1, kernel_size=3, kv_stride=2):
    C = params["proj_w"].shape[0]
    head_dim = C // num_heads
    scale = head_dim ** -0.5

    def fold_sepconv(p, out_scale):
        dw_hwio = jnp.transpose(p["dw_w"], (2, 3, 1, 0))            # (C,1,kh,kw) -> (kh,kw,1,C)
        s = p["bn_gamma"] / jnp.sqrt(p["bn_var"] + BN_EPS)          # BN(eval) as channel affine
        t = p["bn_beta"] - p["bn_mean"] * s
        wp = p["pw_w"][:, :, 0, 0]                                  # (C_out, C_in)
        w_eff = (wp * s[None, :]).T * out_scale                     # (C_in, C_out)
        b_eff = (wp @ t + p["pw_b"]) * out_scale                    # (C_out,)
        return dw_hwio, p["dw_b"], w_eff, b_eff.reshape(1, C)

    q_dw_w, q_dw_b, q_w, q_b = fold_sepconv(params["to_q"], scale)  # fold attention scale into q
    k_dw_w, k_dw_b, k_w, k_b = fold_sepconv(params["to_k"], 1.0)
    v_dw_w, v_dw_b, v_w, v_b = fold_sepconv(params["to_v"], 1.0)

    # K/V token count after the stride-2 depthwise conv.
    Ho = (H + 2 * pad - kernel_size) // kv_stride + 1
    Wo = (W + 2 * pad - kernel_size) // kv_stride + 1
    Nk = Ho * Wo
    # Block mask: mask[h*Nk + j, c] = 1 iff channel c belongs to head h.
    row_head = jnp.arange(num_heads * Nk) // Nk
    col_head = jnp.arange(C) // head_dim
    head_mask = (row_head[:, None] == col_head[None, :]).astype(jnp.float32)

    return {
        "q_dw_w": q_dw_w, "q_dw_b": q_dw_b, "q_w": q_w, "q_b": q_b,
        "k_dw_w": k_dw_w, "k_dw_b": k_dw_b, "k_w": k_w, "k_b": k_b,
        "v_dw_w": v_dw_w, "v_dw_b": v_dw_b, "v_w": v_w, "v_b": v_b,
        "head_mask": head_mask,
        "proj_w": params["proj_w"].T,            # (C_in, C_out) for row-major y @ W
        "proj_b": params["proj_b"].reshape(1, C),
    }


# ---------------------------------------------------------------------------
# Full forward (use_convproj=True branch of the PyTorch module, eval mode).
# ---------------------------------------------------------------------------
@functools.partial(jax.jit, static_argnames=("num_heads", "H", "W"))
def attention_forward(x, prepared, *, num_heads, H, W):
    B, N, C = x.shape
    img = x.reshape(B, H, W, C)                  # 'b (l w) n' is already channel-last: free reshape
    yq = _depthwise_conv_nhwc(img, prepared["q_dw_w"], prepared["q_dw_b"], 1, 1)   # (B, H, W, C)
    yk = _depthwise_conv_nhwc(img, prepared["k_dw_w"], prepared["k_dw_b"], 2, 1)
    yv = _depthwise_conv_nhwc(img, prepared["v_dw_w"], prepared["v_dw_b"], 2, 1)
    Nq = yq.shape[1] * yq.shape[2]
    Nk = yk.shape[1] * yk.shape[2]
    yq = yq.reshape(B, Nq, C)
    yk = yk.reshape(B, Nk, C)
    yv = yv.reshape(B, Nk, C)
    return fused_attention(yq, yk, yv, prepared, num_heads=num_heads)


# ---------------------------------------------------------------------------
# Pure-JAX reference (direct transcription of the PyTorch forward, NCHW, HIGHEST precision).
# ---------------------------------------------------------------------------
def _sepconv_ref(x_img, p, stride, pad):
    C = x_img.shape[1]
    hp = lax.Precision.HIGHEST
    y = lax.conv_general_dilated(
        x_img, p["dw_w"], (stride, stride), [(pad, pad), (pad, pad)],
        dimension_numbers=("NCHW", "OIHW", "NCHW"), feature_group_count=C, precision=hp)
    y = y + p["dw_b"][None, :, None, None]
    s = p["bn_gamma"] / jnp.sqrt(p["bn_var"] + BN_EPS)
    y = (y - p["bn_mean"][None, :, None, None]) * s[None, :, None, None] \
        + p["bn_beta"][None, :, None, None]
    y = lax.conv_general_dilated(
        y, p["pw_w"], (1, 1), [(0, 0), (0, 0)],
        dimension_numbers=("NCHW", "OIHW", "NCHW"), precision=hp)
    return y + p["pw_b"][None, :, None, None]


def attention_reference(x, params, *, num_heads, H, W):
    B, N, C = x.shape
    d = C // num_heads
    scale = d ** -0.5
    hp = lax.Precision.HIGHEST
    x_img = jnp.transpose(x, (0, 2, 1)).reshape(B, C, H, W)

    def to_heads(y):  # 'b (h d) l w -> b h (l w) d'
        Bq, Cq, Ho, Wo = y.shape
        return jnp.transpose(y.reshape(Bq, num_heads, d, Ho * Wo), (0, 1, 3, 2))

    q = to_heads(_sepconv_ref(x_img, params["to_q"], 1, 1))
    k = to_heads(_sepconv_ref(x_img, params["to_k"], 2, 1))
    v = to_heads(_sepconv_ref(x_img, params["to_v"], 2, 1))
    attn = jnp.einsum("bhid,bhjd->bhij", q, k, precision=hp) * scale
    attn = jax.nn.softmax(attn, axis=-1)
    out = jnp.einsum("bhij,bhjd->bhid", attn, v, precision=hp)                 # (B, h, N, d)
    out = jnp.transpose(out, (0, 2, 1, 3)).reshape(B, N, C)                    # 'b h n d -> b n (h d)'
    return jnp.dot(out, params["proj_w"].T, precision=hp) + params["proj_b"]


if __name__ == "__main__":
    # dim=32 with the module-default num_heads=8; H=W=8 -> N=64 query tokens, Nk=16 kv tokens.
    B, C, H, W = 2, 32, 8, 8
    num_heads = 8
    N = H * W

    root = jax.random.PRNGKey(0)

    def make_sepconv_params(key):
        ks = jax.random.split(key, 8)
        return {
            "dw_w": 0.2 * jax.random.normal(ks[0], (C, 1, 3, 3), jnp.float32),
            "dw_b": 0.1 * jax.random.normal(ks[1], (C,), jnp.float32),
            "bn_gamma": 1.0 + 0.1 * jax.random.normal(ks[2], (C,), jnp.float32),
            "bn_beta": 0.1 * jax.random.normal(ks[3], (C,), jnp.float32),
            "bn_mean": 0.1 * jax.random.normal(ks[4], (C,), jnp.float32),
            "bn_var": 0.5 + jnp.abs(jax.random.normal(ks[5], (C,), jnp.float32)),
            "pw_w": 0.2 * jax.random.normal(ks[6], (C, C, 1, 1), jnp.float32),
            "pw_b": 0.1 * jax.random.normal(ks[7], (C,), jnp.float32),
        }

    kq, kk, kv, kpw, kpb, kx = jax.random.split(root, 6)
    params = {
        "to_q": make_sepconv_params(kq),
        "to_k": make_sepconv_params(kk),
        "to_v": make_sepconv_params(kv),
        "proj_w": 0.2 * jax.random.normal(kpw, (C, C), jnp.float32),
        "proj_b": 0.1 * jax.random.normal(kpb, (C,), jnp.float32),
    }
    x = jax.random.normal(kx, (B, N, C), jnp.float32)

    prepared = prepare_params(params, num_heads=num_heads, H=H, W=W)
    out = attention_forward(x, prepared, num_heads=num_heads, H=H, W=W)
    out = jax.block_until_ready(out)

    ref = attention_reference(x, params, num_heads=num_heads, H=H, W=W)
    assert out.shape == (B, N, C), out.shape
    max_err = float(jnp.max(jnp.abs(out - ref)))
    assert jnp.allclose(out, ref, atol=1e-3, rtol=1e-3), f"max abs err = {max_err}"
    print("KERNEL_OK")
</pallas_src>

<mosaic_0001>
module attributes {stable_mosaic.version = 11 : i64} {
  func.func @_fused_attention_kernel(%arg0: i32, %arg1: memref<1x64x32xf32, #tpu.memory_space<vmem>>, %arg2: memref<1x16x32xf32, #tpu.memory_space<vmem>>, %arg3: memref<1x16x32xf32, #tpu.memory_space<vmem>>, %arg4: memref<32x32xf32, #tpu.memory_space<vmem>>, %arg5: memref<1x32xf32, #tpu.memory_space<vmem>>, %arg6: memref<32x32xf32, #tpu.memory_space<vmem>>, %arg7: memref<1x32xf32, #tpu.memory_space<vmem>>, %arg8: memref<32x32xf32, #tpu.memory_space<vmem>>, %arg9: memref<1x32xf32, #tpu.memory_space<vmem>>, %arg10: memref<128x32xf32, #tpu.memory_space<vmem>>, %arg11: memref<32x32xf32, #tpu.memory_space<vmem>>, %arg12: memref<1x32xf32, #tpu.memory_space<vmem>>, %arg13: memref<1x64x32xf32, #tpu.memory_space<vmem>>) attributes {dimension_semantics = [#tpu.dimension_semantics<parallel>], iteration_bounds = array<i64: 2>, scalar_prefetch = 0 : i64, scratch_operands = 0 : i64, tpu.core_type = #tpu.core_type<tc>, window_params = [{transform_indices = @transform_0, window_bounds = array<i64: 1, 64, 32>}, {transform_indices = @transform_1, window_bounds = array<i64: 1, 16, 32>}, {transform_indices = @transform_2, window_bounds = array<i64: 1, 16, 32>}, {pipeline_mode = #tpu.pipeline_mode<synchronous>, transform_indices = @transform_3, window_bounds = array<i64: 32, 32>}, {pipeline_mode = #tpu.pipeline_mode<synchronous>, transform_indices = @transform_4, window_bounds = array<i64: 1, 32>}, {pipeline_mode = #tpu.pipeline_mode<synchronous>, transform_indices = @transform_5, window_bounds = array<i64: 32, 32>}, {pipeline_mode = #tpu.pipeline_mode<synchronous>, transform_indices = @transform_6, window_bounds = array<i64: 1, 32>}, {pipeline_mode = #tpu.pipeline_mode<synchronous>, transform_indices = @transform_7, window_bounds = array<i64: 32, 32>}, {pipeline_mode = #tpu.pipeline_mode<synchronous>, transform_indices = @transform_8, window_bounds = array<i64: 1, 32>}, {pipeline_mode = #tpu.pipeline_mode<synchronous>, transform_indices = @transform_9, window_bounds = array<i64: 128, 32>}, {pipeline_mode = #tpu.pipeline_mode<synchronous>, transform_indices = @transform_10, window_bounds = array<i64: 32, 32>}, {pipeline_mode = #tpu.pipeline_mode<synchronous>, transform_indices = @transform_11, window_bounds = array<i64: 1, 32>}, {transform_indices = @transform_12, window_bounds = array<i64: 1, 64, 32>}]} {
    %c0 = arith.constant 0 : index
    %c0_0 = arith.constant 0 : index
    %c0_1 = arith.constant 0 : index
    %0 = vector.load %arg1[%c0, %c0_0, %c0_1] : memref<1x64x32xf32, #tpu.memory_space<vmem>>, vector<1x64x32xf32>
    %1 = vector.shape_cast %0 : vector<1x64x32xf32> to vector<64x32xf32>
    %c0_2 = arith.constant 0 : index
    %c0_3 = arith.constant 0 : index
    %c0_4 = arith.constant 0 : index
    %2 = vector.load %arg2[%c0_2, %c0_3, %c0_4] : memref<1x16x32xf32, #tpu.memory_space<vmem>>, vector<1x16x32xf32>
    %3 = vector.shape_cast %2 : vector<1x16x32xf32> to vector<16x32xf32>
    %c0_5 = arith.constant 0 : index
    %c0_6 = arith.constant 0 : index
    %c0_7 = arith.constant 0 : index
    %4 = vector.load %arg3[%c0_5, %c0_6, %c0_7] : memref<1x16x32xf32, #tpu.memory_space<vmem>>, vector<1x16x32xf32>
    %5 = vector.shape_cast %4 : vector<1x16x32xf32> to vector<16x32xf32>
    %c0_8 = arith.constant 0 : index
    %c0_9 = arith.constant 0 : index
    %6 = vector.load %arg4[%c0_8, %c0_9] : memref<32x32xf32, #tpu.memory_space<vmem>>, vector<32x32xf32>
    %cst = arith.constant dense<0.000000e+00> : vector<64x32xf32>
    %7 = tpu.matmul %1, %6, %cst {dimension_numbers = #tpu.dot_dimension_numbers<[1], [0], [0], [1], [0, 0, 1, 1], [], []>} : vector<64x32xf32>, vector<32x32xf32>, vector<64x32xf32> -> vector<64x32xf32>
    %c0_10 = arith.constant 0 : index
    %c0_11 = arith.constant 0 : index
    %8 = vector.load %arg5[%c0_10, %c0_11] : memref<1x32xf32, #tpu.memory_space<vmem>>, vector<1x32xf32>
    %9 = vector.broadcast %8 : vector<1x32xf32> to vector<64x32xf32>
    %10 = arith.addf %7, %9 : vector<64x32xf32>
    %c0_12 = arith.constant 0 : index
    %c0_13 = arith.constant 0 : index
    %11 = vector.load %arg6[%c0_12, %c0_13] : memref<32x32xf32, #tpu.memory_space<vmem>>, vector<32x32xf32>
    %cst_14 = arith.constant dense<0.000000e+00> : vector<16x32xf32>
    %12 = tpu.matmul %3, %11, %cst_14 {dimension_numbers = #tpu.dot_dimension_numbers<[1], [0], [0], [1], [0, 0, 1, 1], [], []>} : vector<16x32xf32>, vector<32x32xf32>, vector<16x32xf32> -> vector<16x32xf32>
    %c0_15 = arith.constant 0 : index
    %c0_16 = arith.constant 0 : index
    %13 = vector.load %arg7[%c0_15, %c0_16] : memref<1x32xf32, #tpu.memory_space<vmem>>, vector<1x32xf32>
    %14 = vector.broadcast %13 : vector<1x32xf32> to vector<16x32xf32>
    %15 = arith.addf %12, %14 : vector<16x32xf32>
    %c0_17 = arith.constant 0 : index
    %c0_18 = arith.constant 0 : index
    %16 = vector.load %arg8[%c0_17, %c0_18] : memref<32x32xf32, #tpu.memory_space<vmem>>, vector<32x32xf32>
    %cst_19 = arith.constant dense<0.000000e+00> : vector<16x32xf32>
    %17 = tpu.matmul %5, %16, %cst_19 {dimension_numbers = #tpu.dot_dimension_numbers<[1], [0], [0], [1], [0, 0, 1, 1], [], []>} : vector<16x32xf32>, vector<32x32xf32>, vector<16x32xf32> -> vector<16x32xf32>
    %c0_20 = arith.constant 0 : index
    %c0_21 = arith.constant 0 : index
    %18 = vector.load %arg9[%c0_20, %c0_21] : memref<1x32xf32, #tpu.memory_space<vmem>>, vector<1x32xf32>
    %19 = vector.broadcast %18 : vector<1x32xf32> to vector<16x32xf32>
    %20 = arith.addf %17, %19 : vector<16x32xf32>
    %c0_22 = arith.constant 0 : index
    %c0_23 = arith.constant 0 : index
    %21 = vector.load %arg10[%c0_22, %c0_23] : memref<128x32xf32, #tpu.memory_space<vmem>>, vector<128x32xf32>
    %22 = tpu.concatenate %15, %15, %15, %15, %15, %15, %15, %15 in 0 : vector<16x32xf32>, vector<16x32xf32>, vector<16x32xf32>, vector<16x32xf32>, vector<16x32xf32>, vector<16x32xf32>, vector<16x32xf32>, vector<16x32xf32> -> vector<128x32xf32>
    %23 = arith.mulf %22, %21 : vector<128x32xf32>
    %24 = tpu.concatenate %20, %20, %20, %20, %20, %20, %20, %20 in 0 : vector<16x32xf32>, vector<16x32xf32>, vector<16x32xf32>, vector<16x32xf32>, vector<16x32xf32>, vector<16x32xf32>, vector<16x32xf32>, vector<16x32xf32> -> vector<128x32xf32>
    %25 = arith.mulf %24, %21 : vector<128x32xf32>
    %cst_24 = arith.constant dense<0.000000e+00> : vector<64x128xf32>
    %26 = tpu.matmul %10, %23, %cst_24 {dimension_numbers = #tpu.dot_dimension_numbers<[1], [1], [0], [0], [0, 0, 1, 0], [], []>} : vector<64x32xf32>, vector<128x32xf32>, vector<64x128xf32> -> vector<64x128xf32>
    %cst_25 = arith.constant dense<0xFF800000> : vector<64xf32>
    %27 = vector.multi_reduction <maximumf>, %26, %cst_25 [1] : vector<64x128xf32> to vector<64xf32>
    %28 = vector.shape_cast %27 : vector<64xf32> to vector<64x1xf32>
    %29 = vector.broadcast %28 : vector<64x1xf32> to vector<64x128xf32>
    %30 = arith.subf %26, %29 : vector<64x128xf32>
    %31 = math.exp %30 : vector<64x128xf32>
    %cst_26 = arith.constant dense<0.000000e+00> : vector<64x32xf32>
    %32 = tpu.matmul %31, %21, %cst_26 {dimension_numbers = #tpu.dot_dimension_numbers<[1], [0], [0], [1], [0, 0, 1, 1], [], []>} : vector<64x128xf32>, vector<128x32xf32>, vector<64x32xf32> -> vector<64x32xf32>
    %cst_27 = arith.constant dense<0.000000e+00> : vector<64x32xf32>
    %33 = tpu.matmul %31, %25, %cst_27 {dimension_numbers = #tpu.dot_dimension_numbers<[1], [0], [0], [1], [0, 0, 1, 1], [], []>} : vector<64x128xf32>, vector<128x32xf32>, vector<64x32xf32> -> vector<64x32xf32>
    %34 = arith.divf %33, %32 : vector<64x32xf32>
    %c0_28 = arith.constant 0 : index
    %c0_29 = arith.constant 0 : index
    %35 = vector.load %arg11[%c0_28, %c0_29] : memref<32x32xf32, #tpu.memory_space<vmem>>, vector<32x32xf32>
    %cst_30 = arith.constant dense<0.000000e+00> : vector<64x32xf32>
    %36 = tpu.matmul %34, %35, %cst_30 {dimension_numbers = #tpu.dot_dimension_numbers<[1], [0], [0], [1], [0, 0, 1, 1], [], []>} : vector<64x32xf32>, vector<32x32xf32>, vector<64x32xf32> -> vector<64x32xf32>
    %c0_31 = arith.constant 0 : index
    %c0_32 = arith.constant 0 : index
    %37 = vector.load %arg12[%c0_31, %c0_32] : memref<1x32xf32, #tpu.memory_space<vmem>>, vector<1x32xf32>
    %38 = vector.broadcast %37 : vector<1x32xf32> to vector<64x32xf32>
    %39 = arith.addf %36, %38 : vector<64x32xf32>
    %c0_33 = arith.constant 0 : index
    %c0_34 = arith.constant 0 : index
    %c0_35 = arith.constant 0 : index
    %40 = vector.load %arg13[%c0_33, %c0_34, %c0_35] : memref<1x64x32xf32, #tpu.memory_space<vmem>>, vector<1x64x32xf32>
    %41 = vector.shape_cast %40 : vector<1x64x32xf32> to vector<64x32xf32>
    %42 = vector.shape_cast %39 : vector<64x32xf32> to vector<1x64x32xf32>
    tpu.vector_store %arg13[%c0_33, %c0_34, %c0_35], %42 {strides = array<i32>} : memref<1x64x32xf32, #tpu.memory_space<vmem>>, vector<1x64x32xf32>,
    return
  }
  func.func @transform_0(%arg0: i32) -> (i32, i32, i32) {
    %c0_i32 = arith.constant 0 : i32
    %c0_i32_0 = arith.constant 0 : i32
    %c0_i32_1 = arith.constant 0 : i32
    return %arg0, %c0_i32, %c0_i32_0 : i32, i32, i32
  }
  func.func @transform_1(%arg0: i32) -> (i32, i32, i32) {
    %c0_i32 = arith.constant 0 : i32
    %c0_i32_0 = arith.constant 0 : i32
    %c0_i32_1 = arith.constant 0 : i32
    return %arg0, %c0_i32, %c0_i32_0 : i32, i32, i32
  }
  func.func @transform_2(%arg0: i32) -> (i32, i32, i32) {
    %c0_i32 = arith.constant 0 : i32
    %c0_i32_0 = arith.constant 0 : i32
    %c0_i32_1 = arith.constant 0 : i32
    return %arg0, %c0_i32, %c0_i32_0 : i32, i32, i32
  }
  func.func @transform_3(%arg0: i32) -> (i32, i32) {
    %c0_i32 = arith.constant 0 : i32
    %c0_i32_0 = arith.constant 0 : i32
    %c0_i32_1 = arith.constant 0 : i32
    return %c0_i32, %c0_i32_0 : i32, i32
  }
  func.func @transform_4(%arg0: i32) -> (i32, i32) {
    %c0_i32 = arith.constant 0 : i32
    %c0_i32_0 = arith.constant 0 : i32
    %c0_i32_1 = arith.constant 0 : i32
    return %c0_i32, %c0_i32_0 : i32, i32
  }
  func.func @transform_5(%arg0: i32) -> (i32, i32) {
    %c0_i32 = arith.constant 0 : i32
    %c0_i32_0 = arith.constant 0 : i32
    %c0_i32_1 = arith.constant 0 : i32
    return %c0_i32, %c0_i32_0 : i32, i32
  }
  func.func @transform_6(%arg0: i32) -> (i32, i32) {
    %c0_i32 = arith.constant 0 : i32
    %c0_i32_0 = arith.constant 0 : i32
    %c0_i32_1 = arith.constant 0 : i32
    return %c0_i32, %c0_i32_0 : i32, i32
  }
  func.func @transform_7(%arg0: i32) -> (i32, i32) {
    %c0_i32 = arith.constant 0 : i32
    %c0_i32_0 = arith.constant 0 : i32
    %c0_i32_1 = arith.constant 0 : i32
    return %c0_i32, %c0_i32_0 : i32, i32
  }
  func.func @transform_8(%arg0: i32) -> (i32, i32) {
    %c0_i32 = arith.constant 0 : i32
    %c0_i32_0 = arith.constant 0 : i32
    %c0_i32_1 = arith.constant 0 : i32
    return %c0_i32, %c0_i32_0 : i32, i32
  }
  func.func @transform_9(%arg0: i32) -> (i32, i32) {
    %c0_i32 = arith.constant 0 : i32
    %c0_i32_0 = arith.constant 0 : i32
    %c0_i32_1 = arith.constant 0 : i32
    return %c0_i32, %c0_i32_0 : i32, i32
  }
  func.func @transform_10(%arg0: i32) -> (i32, i32) {
    %c0_i32 = arith.constant 0 : i32
    %c0_i32_0 = arith.constant 0 : i32
    %c0_i32_1 = arith.constant 0 : i32
    return %c0_i32, %c0_i32_0 : i32, i32
  }
  func.func @transform_11(%arg0: i32) -> (i32, i32) {
    %c0_i32 = arith.constant 0 : i32
    %c0_i32_0 = arith.constant 0 : i32
    %c0_i32_1 = arith.constant 0 : i32
    return %c0_i32, %c0_i32_0 : i32, i32
  }
  func.func @transform_12(%arg0: i32) -> (i32, i32, i32) {
    %c0_i32 = arith.constant 0 : i32
    %c0_i32_0 = arith.constant 0 : i32
    %c0_i32_1 = arith.constant 0 : i32
    return %arg0, %c0_i32, %c0_i32_0 : i32, i32, i32
  }
}

</mosaic_0001>

<llo_original>
// kernel: attention_forward.1
$region0: #{attention_forward.1}
  #allocation0 [shape = 'u32[]', space=smem, size = 0x4, offset = 0x4, fixed_abs, tag = 'smem constant byte address 0x4 - core index']
  #allocation1 [shape = 'u32[144,128]{1,0:T(1,128)}', space=vmem, size = 0x12000, scoped, tag = 'internal scratch']
  %s0 = inlined_call_operand.vmem [shape: f32[2,64,32], index: 0, kind: input, shape index: {}]
  %s1 = inlined_call_operand.vmem [shape: f32[2,16,32], index: 1, kind: input, shape index: {}]
  %s2 = inlined_call_operand.vmem [shape: f32[2,16,32], index: 2, kind: input, shape index: {}]
  %s3 = inlined_call_operand.vmem [shape: f32[32,32], index: 3, kind: input, shape index: {}]
  %s4 = inlined_call_operand.vmem [shape: f32[1,32], index: 4, kind: input, shape index: {}]
  %s5 = inlined_call_operand.vmem [shape: f32[32,32], index: 5, kind: input, shape index: {}]
  %s6 = inlined_call_operand.vmem [shape: f32[1,32], index: 6, kind: input, shape index: {}]
  %s7 = inlined_call_operand.vmem [shape: f32[32,32], index: 7, kind: input, shape index: {}]
  %s8 = inlined_call_operand.vmem [shape: f32[1,32], index: 8, kind: input, shape index: {}]
  %s9 = inlined_call_operand.vmem [shape: f32[128,32], index: 9, kind: input, shape index: {}]
  %s10 = inlined_call_operand.vmem [shape: f32[32,32], index: 10, kind: input, shape index: {}]
  %s11 = inlined_call_operand.vmem [shape: f32[1,32], index: 11, kind: input, shape index: {}]
  %s12 = inlined_call_operand.vmem [shape: f32[2,64,32], index: 12, kind: output, shape index: {}]
  %s13 = sld [smem:[#allocation0]]
  $region81: #{attention_forward.1} parent=0
    _
  %s15 = ssub.s32 1, %s13
  %s16 = scalar_select 0, %s15, %s13
  loop: start=0, step=1, limit=4
  $region2: #{attention_forward.1} parent=0 // loop_pre_header
    _
  $region3: #{attention_forward.1} parent=0 // loop_header
    %s18 = sphi 0, %s22
    %p19 = scmp.ge.s32.totalorder %s18, 4
    %s28 = sphi 0, %s30
    %s31 = sphi 0, %s28
    %s32 = sphi 0, %s31
    %s48 = sphi 0, %s32
    %s54 = sphi 0, %s56
    %s57 = sphi 0, %s54
    %s58 = sphi 0, %s57
    %s74 = sphi 0, %s58
    %s80 = sphi 0, %s82
    %s83 = sphi 0, %s80
    %s84 = sphi 0, %s83
    %s100 = sphi 0, %s84
    %s104 = sphi 0, %s104
    %s106 = sphi 0, %s104
    %s107 = sphi 0, %s106
    %s121 = sphi 0, %s107
    %s125 = sphi 0, %s125
    %s127 = sphi 0, %s125
    %s128 = sphi 0, %s127
    %s142 = sphi 0, %s128
    %s146 = sphi 0, %s146
    %s148 = sphi 0, %s146
    %s149 = sphi 0, %s148
    %s163 = sphi 0, %s149
    %s167 = sphi 0, %s167
    %s169 = sphi 0, %s167
    %s170 = sphi 0, %s169
    %s184 = sphi 0, %s170
    %s188 = sphi 0, %s188
    %s190 = sphi 0, %s188
    %s191 = sphi 0, %s190
    %s205 = sphi 0, %s191
    %s209 = sphi 0, %s209
    %s211 = sphi 0, %s209
    %s212 = sphi 0, %s211
    %s226 = sphi 0, %s212
    %s230 = sphi 0, %s230
    %s232 = sphi 0, %s230
    %s233 = sphi 0, %s232
    %s247 = sphi 0, %s233
    %s251 = sphi 0, %s251
    %s253 = sphi 0, %s251
    %s254 = sphi 0, %s253
    %s268 = sphi 0, %s254
    %s272 = sphi 0, %s272
    %s274 = sphi 0, %s272
    %s275 = sphi 0, %s274
    %s289 = sphi 0, %s275
    %s295 = sphi 0, %s297
    %s298 = sphi 0, %s295
    %s299 = sphi 0, %s298
    %s315 = sphi 0, %s299
  $region4: #{attention_forward.1} parent=0 // loop_header_branch
    %21 = sbr.rel (%p19) target = $region8
  $region5: #{attention_forward.1} parent=0 // loop_body
    %s23 = ssub.s32 %s18, 1
    %s24 = ssub.s32 %s18, 2
    %s25 = sadd.s32 %s18, 1
    %s26 = ssub.s32 %s18, %s25
    %p27 = scmp.eq.s32.totalorder %s26, 0
    %s29 = sadd.s32 %s28, 1
    %s30 = scalar_select %p27, %s28, %s29
    %p33 = pneg %p27
    %p34 = scmp.eq.s32.totalorder %s18, 1
    %p35 = por %p33, %p34
    %p36 = scmp.ne.s32.totalorder %s28, %s31
    %p37 = scmp.eq.s32.totalorder %s18, 0
    %p38 = por %p36, %p37
    %p39 = scmp.ne.s32.totalorder %s28, %s31
    %p40 = scmp.eq.s32.totalorder %s23, 1
    %p41 = por %p39, %p40
    %p42 = scmp.ne.s32.totalorder %s31, %s32
    %p43 = scmp.eq.s32.totalorder %s23, 0
    %p44 = por %p42, %p43
    %p45 = scmp.ne.s32.totalorder %s31, %s32
    %p46 = scmp.eq.s32.totalorder %s24, 1
    %p47 = por %p45, %p46
    %p49 = scmp.ne.s32.totalorder %s32, %s48
    %p50 = scmp.eq.s32.totalorder %s24, 0
    %p51 = por %p49, %p50
    %s52 = ssub.s32 %s18, %s25
    %p53 = scmp.eq.s32.totalorder %s52, 0
    %s55 = sadd.s32 %s54, 1
    %s56 = scalar_select %p53, %s54, %s55
    %p59 = pneg %p53
    %p60 = scmp.eq.s32.totalorder %s18, 1
    %p61 = por %p59, %p60
    %p62 = scmp.ne.s32.totalorder %s54, %s57
    %p63 = scmp.eq.s32.totalorder %s18, 0
    %p64 = por %p62, %p63
    %p65 = scmp.ne.s32.totalorder %s54, %s57
    %p66 = scmp.eq.s32.totalorder %s23, 1
    %p67 = por %p65, %p66
    %p68 = scmp.ne.s32.totalorder %s57, %s58
    %p69 = scmp.eq.s32.totalorder %s23, 0
    %p70 = por %p68, %p69
    %p71 = scmp.ne.s32.totalorder %s57, %s58
    %p72 = scmp.eq.s32.totalorder %s24, 1
    %p73 = por %p71, %p72
    %p75 = scmp.ne.s32.totalorder %s58, %s74
    %p76 = scmp.eq.s32.totalorder %s24, 0
    %p77 = por %p75, %p76
    %s78 = ssub.s32 %s18, %s25
    %p79 = scmp.eq.s32.totalorder %s78, 0
    %s81 = sadd.s32 %s80, 1
    %s82 = scalar_select %p79, %s80, %s81
    %p85 = pneg %p79
    %p86 = scmp.eq.s32.totalorder %s18, 1
    %p87 = por %p85, %p86
    %p88 = scmp.ne.s32.totalorder %s80, %s83
    %p89 = scmp.eq.s32.totalorder %s18, 0
    %p90 = por %p88, %p89
    %p91 = scmp.ne.s32.totalorder %s80, %s83
    %p92 = scmp.eq.s32.totalorder %s23, 1
    %p93 = por %p91, %p92
    %p94 = scmp.ne.s32.totalorder %s83, %s84
    %p95 = scmp.eq.s32.totalorder %s23, 0
    %p96 = por %p94, %p95
    %p97 = scmp.ne.s32.totalorder %s83, %s84
    %p98 = scmp.eq.s32.totalorder %s24, 1
    %p99 = por %p97, %p98
    %p101 = scmp.ne.s32.totalorder %s84, %s100
    %p102 = scmp.eq.s32.totalorder %s24, 0
    %p103 = por %p101, %p102
    %s105 = sadd.s32 %s104, 1
    %p108 = scmp.eq.s32.totalorder %s18, 1
    %p109 = scmp.ne.s32.totalorder %s104, %s106
    %p110 = scmp.eq.s32.totalorder %s18, 0
    %p111 = por %p109, %p110
    %p112 = scmp.ne.s32.totalorder %s104, %s106
    %p113 = scmp.eq.s32.totalorder %s23, 1
    %p114 = por %p112, %p113
    %p115 = scmp.ne.s32.totalorder %s106, %s107
    %p116 = scmp.eq.s32.totalorder %s23, 0
    %p117 = por %p115, %p116
    %p118 = scmp.ne.s32.totalorder %s106, %s107
    %p119 = scmp.eq.s32.totalorder %s24, 1
    %p120 = por %p118, %p119
    %p122 = scmp.ne.s32.totalorder %s107, %s121
    %p123 = scmp.eq.s32.totalorder %s24, 0
    %p124 = por %p122, %p123
    %s126 = sadd.s32 %s125, 1
    %p129 = scmp.eq.s32.totalorder %s18, 1
    %p130 = scmp.ne.s32.totalorder %s125, %s127
    %p131 = scmp.eq.s32.totalorder %s18, 0
    %p132 = por %p130, %p131
    %p133 = scmp.ne.s32.totalorder %s125, %s127
    %p134 = scmp.eq.s32.totalorder %s23, 1
    %p135 = por %p133, %p134
    %p136 = scmp.ne.s32.totalorder %s127, %s128
    %p137 = scmp.eq.s32.totalorder %s23, 0
    %p138 = por %p136, %p137
    %p139 = scmp.ne.s32.totalorder %s127, %s128
    %p140 = scmp.eq.s32.totalorder %s24, 1
    %p141 = por %p139, %p140
    %p143 = scmp.ne.s32.totalorder %s128, %s142
    %p144 = scmp.eq.s32.totalorder %s24, 0
    %p145 = por %p143, %p144
    %s147 = sadd.s32 %s146, 1
    %p150 = scmp.eq.s32.totalorder %s18, 1
    %p151 = scmp.ne.s32.totalorder %s146, %s148
    %p152 = scmp.eq.s32.totalorder %s18, 0
    %p153 = por %p151, %p152
    %p154 = scmp.ne.s32.totalorder %s146, %s148
    %p155 = scmp.eq.s32.totalorder %s23, 1
    %p156 = por %p154, %p155
    %p157 = scmp.ne.s32.totalorder %s148, %s149
    %p158 = scmp.eq.s32.totalorder %s23, 0
    %p159 = por %p157, %p158
    %p160 = scmp.ne.s32.totalorder %s148, %s149
    %p161 = scmp.eq.s32.totalorder %s24, 1
    %p162 = por %p160, %p161
    %p164 = scmp.ne.s32.totalorder %s149, %s163
    %p165 = scmp.eq.s32.totalorder %s24, 0
    %p166 = por %p164, %p165
    %s168 = sadd.s32 %s167, 1
    %p171 = scmp.eq.s32.totalorder %s18, 1
    %p172 = scmp.ne.s32.totalorder %s167, %s169
    %p173 = scmp.eq.s32.totalorder %s18, 0
    %p174 = por %p172, %p173
    %p175 = scmp.ne.s32.totalorder %s167, %s169
    %p176 = scmp.eq.s32.totalorder %s23, 1
    %p177 = por %p175, %p176
    %p178 = scmp.ne.s32.totalorder %s169, %s170
    %p179 = scmp.eq.s32.totalorder %s23, 0
    %p180 = por %p178, %p179
    %p181 = scmp.ne.s32.totalorder %s169, %s170
    %p182 = scmp.eq.s32.totalorder %s24, 1
    %p183 = por %p181, %p182
    %p185 = scmp.ne.s32.totalorder %s170, %s184
    %p186 = scmp.eq.s32.totalorder %s24, 0
    %p187 = por %p185, %p186
    %s189 = sadd.s32 %s188, 1
    %p192 = scmp.eq.s32.totalorder %s18, 1
    %p193 = scmp.ne.s32.totalorder %s188, %s190
    %p194 = scmp.eq.s32.totalorder %s18, 0
    %p195 = por %p193, %p194
    %p196 = scmp.ne.s32.totalorder %s188, %s190
    %p197 = scmp.eq.s32.totalorder %s23, 1
    %p198 = por %p196, %p197
    %p199 = scmp.ne.s32.totalorder %s190, %s191
    %p200 = scmp.eq.s32.totalorder %s23, 0
    %p201 = por %p199, %p200
    %p202 = scmp.ne.s32.totalorder %s190, %s191
    %p203 = scmp.eq.s32.totalorder %s24, 1
    %p204 = por %p202, %p203
    %p206 = scmp.ne.s32.totalorder %s191, %s205
    %p207 = scmp.eq.s32.totalorder %s24, 0
    %p208 = por %p206, %p207
    %s210 = sadd.s32 %s209, 1
    %p213 = scmp.eq.s32.totalorder %s18, 1
    %p214 = scmp.ne.s32.totalorder %s209, %s211
    %p215 = scmp.eq.s32.totalorder %s18, 0
    %p216 = por %p214, %p215
    %p217 = scmp.ne.s32.totalorder %s209, %s211
    %p218 = scmp.eq.s32.totalorder %s23, 1
    %p219 = por %p217, %p218
    %p220 = scmp.ne.s32.totalorder %s211, %s212
    %p221 = scmp.eq.s32.totalorder %s23, 0
    %p222 = por %p220, %p221
    %p223 = scmp.ne.s32.totalorder %s211, %s212
    %p224 = scmp.eq.s32.totalorder %s24, 1
    %p225 = por %p223, %p224
    %p227 = scmp.ne.s32.totalorder %s212, %s226
    %p228 = scmp.eq.s32.totalorder %s24, 0
    %p229 = por %p227, %p228
    %s231 = sadd.s32 %s230, 1
    %p234 = scmp.eq.s32.totalorder %s18, 1
    %p235 = scmp.ne.s32.totalorder %s230, %s232
    %p236 = scmp.eq.s32.totalorder %s18, 0
    %p237 = por %p235, %p236
    %p238 = scmp.ne.s32.totalorder %s230, %s232
    %p239 = scmp.eq.s32.totalorder %s23, 1
    %p240 = por %p238, %p239
    %p241 = scmp.ne.s32.totalorder %s232, %s233
    %p242 = scmp.eq.s32.totalorder %s23, 0
    %p243 = por %p241, %p242
    %p244 = scmp.ne.s32.totalorder %s232, %s233
    %p245 = scmp.eq.s32.totalorder %s24, 1
    %p246 = por %p244, %p245
    %p248 = scmp.ne.s32.totalorder %s233, %s247
    %p249 = scmp.eq.s32.totalorder %s24, 0
    %p250 = por %p248, %p249
    %s252 = sadd.s32 %s251, 1
    %p255 = scmp.eq.s32.totalorder %s18, 1
    %p256 = scmp.ne.s32.totalorder %s251, %s253
    %p257 = scmp.eq.s32.totalorder %s18, 0
    %p258 = por %p256, %p257
    %p259 = scmp.ne.s32.totalorder %s251, %s253
    %p260 = scmp.eq.s32.totalorder %s23, 1
    %p261 = por %p259, %p260
    %p262 = scmp.ne.s32.totalorder %s253, %s254
    %p263 = scmp.eq.s32.totalorder %s23, 0
    %p264 = por %p262, %p263
    %p265 = scmp.ne.s32.totalorder %s253, %s254
    %p266 = scmp.eq.s32.totalorder %s24, 1
    %p267 = por %p265, %p266
    %p269 = scmp.ne.s32.totalorder %s254, %s268
    %p270 = scmp.eq.s32.totalorder %s24, 0
    %p271 = por %p269, %p270
    %s273 = sadd.s32 %s272, 1
    %p276 = scmp.eq.s32.totalorder %s18, 1
    %p277 = scmp.ne.s32.totalorder %s272, %s274
    %p278 = scmp.eq.s32.totalorder %s18, 0
    %p279 = por %p277, %p278
    %p280 = scmp.ne.s32.totalorder %s272, %s274
    %p281 = scmp.eq.s32.totalorder %s23, 1
    %p282 = por %p280, %p281
    %p283 = scmp.ne.s32.totalorder %s274, %s275
    %p284 = scmp.eq.s32.totalorder %s23, 0
    %p285 = por %p283, %p284
    %p286 = scmp.ne.s32.totalorder %s274, %s275
    %p287 = scmp.eq.s32.totalorder %s24, 1
    %p288 = por %p286, %p287
    %p290 = scmp.ne.s32.totalorder %s275, %s289
    %p291 = scmp.eq.s32.totalorder %s24, 0
    %p292 = por %p290, %p291
    %s293 = ssub.s32 %s18, %s25
    %p294 = scmp.eq.s32.totalorder %s293, 0
    %s296 = sadd.s32 %s295, 1
    %s297 = scalar_select %p294, %s295, %s296
    %p300 = pneg %p294
    %p301 = scmp.eq.s32.totalorder %s18, 1
    %p302 = por %p300, %p301
    %p303 = scmp.ne.s32.totalorder %s295, %s298
    %p304 = scmp.eq.s32.totalorder %s18, 0
    %p305 = por %p303, %p304
    %p306 = scmp.ne.s32.totalorder %s295, %s298
    %p307 = scmp.eq.s32.totalorder %s23, 1
    %p308 = por %p306, %p307
    %p309 = scmp.ne.s32.totalorder %s298, %s299
    %p310 = scmp.eq.s32.totalorder %s23, 0
    %p311 = por %p309, %p310
    %p312 = scmp.ne.s32.totalorder %s298, %s299
    %p313 = scmp.eq.s32.totalorder %s24, 1
    %p314 = por %p312, %p313
    %p316 = scmp.ne.s32.totalorder %s299, %s315
    %p317 = scmp.eq.s32.totalorder %s24, 0
    %p318 = por %p316, %p317
    %p319 = scmp.le.s32.totalorder 1, %s18
    %p320 = scmp.lt.s32.totalorder %s18, 3
    %p321 = pnand %p319, %p320
    %p322 = pneg %p321
    // Predicated region
    $region9: #{attention_forward.1} parent=5 // pred_check
      _
    $region10: #{attention_forward.1} parent=5 // pred_check_branch
      %324 = sbr.rel (%p321) target = $region12
    $region11: #{attention_forward.1} parent=5 // pred_region
      %s325 = ssub.s32 %s18, 1
      // Predicated region
      $region13: #{attention_forward.1} parent=11 // pred_check
        %p326 = pneg %p117
      $region14: #{attention_forward.1} parent=11 // pred_check_branch
        %328 = sbr.rel (%p326) target = $region16
      $region15: #{attention_forward.1} parent=11 // pred_region
        _
      $region16: #{attention_forward.1} parent=11 // pred_fallthru
        _
      // Predicated region
      $region17: #{attention_forward.1} parent=11 // pred_check
        %p329 = pneg %p138
      $region18: #{attention_forward.1} parent=11 // pred_check_branch
        %331 = sbr.rel (%p329) target = $region20
      $region19: #{attention_forward.1} parent=11 // pred_region
        _
      $region20: #{attention_forward.1} parent=11 // pred_fallthru
        _
      // Predicated region
      $region21: #{attention_forward.1} parent=11 // pred_check
        %p332 = pneg %p159
      $region22: #{attention_forward.1} parent=11 // pred_check_branch
        %334 = sbr.rel (%p332) target = $region24
      $region23: #{attention_forward.1} parent=11 // pred_region
        _
      $region24: #{attention_forward.1} parent=11 // pred_fallthru
        _
      // Predicated region
      $region25: #{attention_forward.1} parent=11 // pred_check
        %p335 = pneg %p180
      $region26: #{attention_forward.1} parent=11 // pred_check_branch
        %337 = sbr.rel (%p335) target = $region28
      $region27: #{attention_forward.1} parent=11 // pred_region
        _
      $region28: #{attention_forward.1} parent=11 // pred_fallthru
        _
      // Predicated region
      $region29: #{attention_forward.1} parent=11 // pred_check
        %p338 = pneg %p201
      $region30: #{attention_forward.1} parent=11 // pred_check_branch
        %340 = sbr.rel (%p338) target = $region32
      $region31: #{attention_forward.1} parent=11 // pred_region
        _
      $region32: #{attention_forward.1} parent=11 // pred_fallthru
        _
      // Predicated region
      $region33: #{attention_forward.1} parent=11 // pred_check
        %p341 = pneg %p222
      $region34: #{attention_forward.1} parent=11 // pred_check_branch
        %343 = sbr.rel (%p341) target = $region36
      $region35: #{attention_forward.1} parent=11 // pred_region
        _
      $region36: #{attention_forward.1} parent=11 // pred_fallthru
        _
      // Predicated region
      $region37: #{attention_forward.1} parent=11 // pred_check
        %p344 = pneg %p243
      $region38: #{attention_forward.1} parent=11 // pred_check_branch
        %346 = sbr.rel (%p344) target = $region40
      $region39: #{attention_forward.1} parent=11 // pred_region
        _
      $region40: #{attention_forward.1} parent=11 // pred_fallthru
        _
      // Predicated region
      $region41: #{attention_forward.1} parent=11 // pred_check
        %p347 = pneg %p264
      $region42: #{attention_forward.1} parent=11 // pred_check_branch
        %349 = sbr.rel (%p347) target = $region44
      $region43: #{attention_forward.1} parent=11 // pred_region
        _
      $region44: #{attention_forward.1} parent=11 // pred_fallthru
        _
      // Predicated region
      $region45: #{attention_forward.1} parent=11 // pred_check
        %p350 = pneg %p285
      $region46: #{attention_forward.1} parent=11 // pred_check_branch
        %352 = sbr.rel (%p350) target = $region48
      $region47: #{attention_forward.1} parent=11 // pred_region
        _
      $region48: #{attention_forward.1} parent=11 // pred_fallthru
        _
    $region12: #{attention_forward.1} parent=5 // pred_fallthru
      _
    %p353 = scmp.lt.s32.totalorder %s18, 2
    // Predicated region
    $region49: #{attention_forward.1} parent=5 // pred_check
      %p354 = pneg %p353
    $region50: #{attention_forward.1} parent=5 // pred_check_branch
      %356 = sbr.rel (%p354) target = $region52
    $region51: #{attention_forward.1} parent=5 // pred_region
      // Predicated region
      $region53: #{attention_forward.1} parent=51 // pred_check
        %p357 = pneg %p38
      $region54: #{attention_forward.1} parent=51 // pred_check_branch
        %359 = sbr.rel (%p357) target = $region56
      $region55: #{attention_forward.1} parent=51 // pred_region
        %p360 = scmp.lt.s32.totalorder %s18, 1
        %s361 = scalar_select %p360, %s18, 1
        %s362 = smul.addr %s361, 8
        %s363 = smul.addr %s362, 8
        %s364 = scalar_lea.vmem %s0, %s363
      $region56: #{attention_forward.1} parent=51 // pred_fallthru
        _
      // Predicated region
      $region57: #{attention_forward.1} parent=51 // pred_check
        %p365 = pneg %p64
      $region58: #{attention_forward.1} parent=51 // pred_check_branch
        %367 = sbr.rel (%p365) target = $region60
      $region59: #{attention_forward.1} parent=51 // pred_region
        %p368 = scmp.lt.s32.totalorder %s18, 1
        %s369 = scalar_select %p368, %s18, 1
        %s370 = smul.addr %s369, 2
        %s371 = smul.addr %s370, 8
        %s372 = scalar_lea.vmem %s1, %s371
      $region60: #{attention_forward.1} parent=51 // pred_fallthru
        _
      // Predicated region
      $region61: #{attention_forward.1} parent=51 // pred_check
        %p373 = pneg %p90
      $region62: #{attention_forward.1} parent=51 // pred_check_branch
        %375 = sbr.rel (%p373) target = $region64
      $region63: #{attention_forward.1} parent=51 // pred_region
        %p376 = scmp.lt.s32.totalorder %s18, 1
        %s377 = scalar_select %p376, %s18, 1
        %s378 = smul.addr %s377, 2
        %s379 = smul.addr %s378, 8
        %s380 = scalar_lea.vmem %s2, %s379
      $region64: #{attention_forward.1} parent=51 // pred_fallthru
        _
    $region52: #{attention_forward.1} parent=5 // pred_fallthru
      _
    %p381 = scmp.le.s32.totalorder 1, %s18
    %p382 = scmp.lt.s32.totalorder %s18, 3
    %p383 = pnand %p381, %p382
    %p384 = pneg %p383
    // Predicated region
    $region65: #{attention_forward.1} parent=5 // pred_check
      _
    $region66: #{attention_forward.1} parent=5 // pred_check_branch
      %386 = sbr.rel (%p383) target = $region68
    $region67: #{attention_forward.1} parent=5 // pred_region
      %s387 = ssub.s32 %s18, 1
      %p388 = scmp.lt.s32.totalorder %s23, 1
      %s389 = scalar_select %p388, %s23, 1
      %s390 = smul.addr %s389, 8
      %s391 = smul.addr %s390, 8
      %s392 = scalar_lea.vmem %s0, %s391
      %p393 = pneg %p44
      %p394 = pneg %p41
      %p395 = scmp.lt.s32.totalorder %s23, 1
      %s396 = scalar_select %p395, %s23, 1
      %s397 = smul.addr %s396, 2
      %s398 = smul.addr %s397, 8
      %s399 = scalar_lea.vmem %s1, %s398
      %p400 = pneg %p70
      %p401 = pneg %p67
      %p402 = scmp.lt.s32.totalorder %s23, 1
      %s403 = scalar_select %p402, %s23, 1
      %s404 = smul.addr %s403, 2
      %s405 = smul.addr %s404, 8
      %s406 = scalar_lea.vmem %s2, %s405
      %p407 = pneg %p96
      %p408 = pneg %p93
      %p409 = pneg %p117
      %p410 = pneg %p114
      %p411 = pneg %p138
      %p412 = pneg %p135
      %p413 = pneg %p159
      %p414 = pneg %p156
      %p415 = pneg %p180
      %p416 = pneg %p177
      %p417 = pneg %p201
      %p418 = pneg %p198
      %p419 = pneg %p222
      %p420 = pneg %p219
      %p421 = pneg %p243
      %p422 = pneg %p240
      %p423 = pneg %p264
      %p424 = pneg %p261
      %p425 = pneg %p285
      %p426 = pneg %p282
      %p427 = pneg %p311
      %p428 = pneg %p308
      %p429 = scmp.lt.s32.totalorder %s23, 1
      %s430 = scalar_select %p429, %s23, 1
      %s431 = smul.addr %s430, 8
      %s432 = smul.addr %s431, 8
      %s433 = scalar_lea.vmem %s12, %s432
      %p434 = scmp.lt.s32.totalorder %s23, 1
      %s435 = scalar_select %p434, %s23, 1
      %s436 = smul.addr %s435, 8
      %s437 = smul.addr %s436, 8
      %s438 = scalar_lea.vmem %s0, %s437
      %p439 = scmp.lt.s32.totalorder %s23, 1
      %s440 = scalar_select %p439, %s23, 1
      %s441 = smul.addr %s440, 2
      %s442 = smul.addr %s441, 8
      %s443 = scalar_lea.vmem %s1, %s442
      %p444 = scmp.lt.s32.totalorder %s23, 1
      %s445 = scalar_select %p444, %s23, 1
      %s446 = smul.addr %s445, 2
      %s447 = smul.addr %s446, 8
      %s448 = scalar_lea.vmem %s2, %s447
      %p449 = scmp.lt.s32.totalorder %s23, 1
      %s450 = scalar_select %p449, %s23, 1
      %s451 = smul.addr %s450, 8
      %s452 = smul.addr %s451, 8
      %s453 = scalar_lea.vmem %s12, %s452
      %v454 = vld [vmem:[%s438] sm:$0xff]
      %v455 = vld [vmem:[%s438 + $0x8] sm:$0xff]
      %v456 = vld [vmem:[%s438 + $0x10] sm:$0xff]
      %v457 = vld [vmem:[%s438 + $0x18] sm:$0xff]
      %v458 = vld [vmem:[%s438 + $0x20] sm:$0xff]
      %v459 = vld [vmem:[%s438 + $0x28] sm:$0xff]
      %v460 = vld [vmem:[%s438 + $0x30] sm:$0xff]
      %v461 = vld [vmem:[%s438 + $0x38] sm:$0xff]
      %v462 = vld [vmem:[%s443] sm:$0xff]
      %v463 = vld [vmem:[%s443 + $0x8] sm:$0xff]
      %v464 = vld [vmem:[%s448] sm:$0xff]
      %v465 = vld [vmem:[%s448 + $0x8] sm:$0xff]
      %v466 = vld [vmem:[%s3] sm:$0xff]
      %v467 = vld [vmem:[%s3 + $0x8] sm:$0xff]
      %v468 = vld [vmem:[%s3 + $0x10] sm:$0xff]
      %v469 = vld [vmem:[%s3 + $0x18] sm:$0xff]
      %v470 = vld [vmem:[%s4] sm:$0x1]
      %v472 = vlaneseq
      %v473 = vshrl.u32 %v472, 7
      %v474 = vsub.s32 0, %v473
      %v475 = vrot.slane %v470, %v474
      %vm477 = vcmask 261120
      %v479 = vsel %vm477, %v454, 0
      %v482 = vsel %vm477, %v455, 0
      %v485 = vsel %vm477, %v456, 0
      %v488 = vsel %vm477, %v457, 0
      %v491 = vsel %vm477, %v458, 0
      %v494 = vsel %vm477, %v459, 0
      %v497 = vsel %vm477, %v460, 0
      %v500 = vsel %vm477, %v461, 0
      %502 = vmatprep.subr.mxu0 0.0
      %503 = vmatpush1.msra.mxu0 %v466
      %504 = vmatprep.subr.mxu0 0.0
      %505 = vmatpush1.msra.mxu0 %v467
      %506 = vmatprep.subr.mxu0 0.0
      %507 = vmatpush1.msra.mxu0 %v468
      %508 = vmatprep.subr.mxu0 0.0
      %509 = vmatpush1.msra.mxu0 %v469
      %510 = vmatprep.subr.mxu0 0.0
      %511 = vmatpush1.msra.mxu0 0.0
      %512 = vmatprep.subr.mxu0 0.0
      %513 = vmatpush1.msra.mxu0 0.0
      %514 = vmatprep.subr.mxu0 0.0
      %515 = vmatpush1.msra.mxu0 0.0
      %516 = vmatprep.subr.mxu0 0.0
      %517 = vmatpush1.msra.mxu0 0.0
      %518 = vmatprep.subr.mxu0 0.0
      %519 = vmatpush1.msra.mxu0 0.0
      %520 = vmatprep.subr.mxu0 0.0
      %521 = vmatpush1.msra.mxu0 0.0
      %522 = vmatprep.subr.mxu0 0.0
      %523 = vmatpush1.msra.mxu0 0.0
      %524 = vmatprep.subr.mxu0 0.0
      %525 = vmatpush1.msra.mxu0 0.0
      %526 = vmatprep.subr.mxu0 0.0
      %527 = vmatpush1.msra.mxu0 0.0
      %528 = vmatprep.subr.mxu0 0.0
      %529 = vmatpush1.msra.mxu0 0.0
      %530 = vmatprep.subr.mxu0 0.0
      %531 = vmatpush1.msra.mxu0 0.0
      %532 = vmatprep.subr.mxu0 0.0
      %533 = vmatpush1.msra.mxu0 0.0
      %534 = vmatprep.subr.mxu0 0.0
      %535 = vmatpush1.msra.mxu0 0.0
      %536 = vmatprep.subr.mxu0 0.0
      %537 = vmatpush1.msra.mxu0 0.0
      %538 = vmatprep.subr.mxu0 0.0
      %539 = vmatpush1.msra.mxu0 0.0
      %540 = vmatprep.subr.mxu0 0.0
      %541 = vmatpush1.msra.mxu0 0.0
      %542 = vmatprep.subr.mxu0 0.0
      %543 = vmatpush1.msra.mxu0 0.0
      %544 = vmatprep.subr.mxu0 0.0
      %545 = vmatpush1.msra.mxu0 0.0
      %546 = vmatprep.subr.mxu0 0.0
      %547 = vmatpush1.msra.mxu0 0.0
      %548 = vmatprep.subr.mxu0 0.0
      %549 = vmatpush1.msra.mxu0 0.0
      %550 = vmatprep.subr.mxu0 0.0
      %551 = vmatpush1.msra.mxu0 0.0
      %552 = vmatprep.subr.mxu0 0.0
      %553 = vmatpush1.msra.mxu0 0.0
      %554 = vmatprep.subr.mxu0 0.0
      %555 = vmatpush1.msra.mxu0 0.0
      %556 = vmatprep.subr.mxu0 0.0
      %557 = vmatpush1.msra.mxu0 0.0
      %558 = vmatprep.subr.mxu0 0.0
      %559 = vmatpush1.msra.mxu0 0.0
      %560 = vmatprep.subr.mxu0 0.0
      %561 = vmatpush1.msra.mxu0 0.0
      %562 = vmatprep.subr.mxu0 0.0
      %563 = vmatpush1.msra.mxu0 0.0
      %564 = vmatprep.subr.mxu0 0.0
      %565 = vmatpush1.msra.mxu0 0.0
      %566 = vmatprep.mubr.f32.mxu0 0.0
      %567 = vmatmul.mubr.f32.gmra.mrb[0].mxu0 %v479
      %v568 = vpop.f32.mrb[0].mxu0
      %v569 = vadd.f32 %v475, %v568
      %v570 = vpop.f32.mrb[0].mxu0
      %571 = vmatprep.mubr.f32.mxu0 0.0
      %572 = vmatmul.mubr.f32.gmra.mrb[0].mxu0 %v482
      %v573 = vpop.f32.mrb[0].mxu0
      %v574 = vadd.f32 %v475, %v573
      %v575 = vpop.f32.mrb[0].mxu0
      %576 = vmatprep.mubr.f32.mxu0 0.0
      %577 = vmatmul.mubr.f32.gmra.mrb[0].mxu0 %v485
      %v578 = vpop.f32.mrb[0].mxu0
      %v579 = vadd.f32 %v475, %v578
      %v580 = vpop.f32.mrb[0].mxu0
      %581 = vmatprep.mubr.f32.mxu0 0.0
      %582 = vmatmul.mubr.f32.gmra.mrb[0].mxu0 %v488
      %v583 = vpop.f32.mrb[0].mxu0
      %v584 = vadd.f32 %v475, %v583
      %v585 = vpop.f32.mrb[0].mxu0
      %586 = vmatprep.mubr.f32.mxu0 0.0
      %587 = vmatmul.mubr.f32.gmra.mrb[0].mxu0 %v491
      %v588 = vpop.f32.mrb[0].mxu0
      %v589 = vadd.f32 %v475, %v588
      %v590 = vpop.f32.mrb[0].mxu0
      %591 = vmatprep.mubr.f32.mxu0 0.0
      %592 = vmatmul.mubr.f32.gmra.mrb[0].mxu0 %v494
      %v593 = vpop.f32.mrb[0].mxu0
      %v594 = vadd.f32 %v475, %v593
      %v595 = vpop.f32.mrb[0].mxu0
      %596 = vmatprep.mubr.f32.mxu0 0.0
      %597 = vmatmul.mubr.f32.gmra.mrb[0].mxu0 %v497
      %v598 = vpop.f32.mrb[0].mxu0
      %v599 = vadd.f32 %v475, %v598
      %v600 = vpop.f32.mrb[0].mxu0
      %601 = vmatprep.mubr.f32.mxu0 0.0
      %602 = vmatmul.mubr.f32.gmra.mrb[0].mxu0 %v500
      %v603 = vpop.f32.mrb[0].mxu0
      %v604 = vadd.f32 %v475, %v603
      %v605 = vpop.f32.mrb[0].mxu0
      %606 = vdwg.mxu0
      %v607 = vld [vmem:[%s5] sm:$0xff]
      %v608 = vld [vmem:[%s5 + $0x8] sm:$0xff]
      %v609 = vld [vmem:[%s5 + $0x10] sm:$0xff]
      %v610 = vld [vmem:[%s5 + $0x18] sm:$0xff]
      %v611 = vld [vmem:[%s6] sm:$0x1]
      %v613 = vlaneseq
      %v614 = vshrl.u32 %v613, 7
      %v615 = vsub.s32 0, %v614
      %v616 = vrot.slane %v611, %v615
      %v619 = vsel %vm477, %v462, 0
      %v622 = vsel %vm477, %v463, 0
      %624 = vmatprep.subr.mxu0 0.0
      %625 = vmatpush1.msra.mxu0 %v607
      %626 = vmatprep.subr.mxu0 0.0
      %627 = vmatpush1.msra.mxu0 %v608
      %628 = vmatprep.subr.mxu0 0.0
      %629 = vmatpush1.msra.mxu0 %v609
      %630 = vmatprep.subr.mxu0 0.0
      %631 = vmatpush1.msra.mxu0 %v610
      %632 = vmatprep.subr.mxu0 0.0
      %633 = vmatpush1.msra.mxu0 0.0
      %634 = vmatprep.subr.mxu0 0.0
      %635 = vmatpush1.msra.mxu0 0.0
      %636 = vmatprep.subr.mxu0 0.0
      %637 = vmatpush1.msra.mxu0 0.0
      %638 = vmatprep.subr.mxu0 0.0
      %639 = vmatpush1.msra.mxu0 0.0
      %640 = vmatprep.subr.mxu0 0.0
      %641 = vmatpush1.msra.mxu0 0.0
      %642 = vmatprep.subr.mxu0 0.0
      %643 = vmatpush1.msra.mxu0 0.0
      %644 = vmatprep.subr.mxu0 0.0
      %645 = vmatpush1.msra.mxu0 0.0
      %646 = vmatprep.subr.mxu0 0.0
      %647 = vmatpush1.msra.mxu0 0.0
      %648 = vmatprep.subr.mxu0 0.0
      %649 = vmatpush1.msra.mxu0 0.0
      %650 = vmatprep.subr.mxu0 0.0
      %651 = vmatpush1.msra.mxu0 0.0
      %652 = vmatprep.subr.mxu0 0.0
      %653 = vmatpush1.msra.mxu0 0.0
      %654 = vmatprep.subr.mxu0 0.0
      %655 = vmatpush1.msra.mxu0 0.0
      %656 = vmatprep.subr.mxu0 0.0
      %657 = vmatpush1.msra.mxu0 0.0
      %658 = vmatprep.subr.mxu0 0.0
      %659 = vmatpush1.msra.mxu0 0.0
      %660 = vmatprep.subr.mxu0 0.0
      %661 = vmatpush1.msra.mxu0 0.0
      %662 = vmatprep.subr.mxu0 0.0
      %663 = vmatpush1.msra.mxu0 0.0
      %664 = vmatprep.subr.mxu0 0.0
      %665 = vmatpush1.msra.mxu0 0.0
      %666 = vmatprep.subr.mxu0 0.0
      %667 = vmatpush1.msra.mxu0 0.0
      %668 = vmatprep.subr.mxu0 0.0
      %669 = vmatpush1.msra.mxu0 0.0
      %670 = vmatprep.subr.mxu0 0.0
      %671 = vmatpush1.msra.mxu0 0.0
      %672 = vmatprep.subr.mxu0 0.0
      %673 = vmatpush1.msra.mxu0 0.0
      %674 = vmatprep.subr.mxu0 0.0
      %675 = vmatpush1.msra.mxu0 0.0
      %676 = vmatprep.subr.mxu0 0.0
      %677 = vmatpush1.msra.mxu0 0.0
      %678 = vmatprep.subr.mxu0 0.0
      %679 = vmatpush1.msra.mxu0 0.0
      %680 = vmatprep.subr.mxu0 0.0
      %681 = vmatpush1.msra.mxu0 0.0
      %682 = vmatprep.subr.mxu0 0.0
      %683 = vmatpush1.msra.mxu0 0.0
      %684 = vmatprep.subr.mxu0 0.0
      %685 = vmatpush1.msra.mxu0 0.0
      %686 = vmatprep.subr.mxu0 0.0
      %687 = vmatpush1.msra.mxu0 0.0
      %688 = vmatprep.mubr.f32.mxu0 0.0
      %689 = vmatmul.mubr.f32.gmra.mrb[0].mxu0 %v619
      %v690 = vpop.f32.mrb[0].mxu0
      %v691 = vadd.f32 %v616, %v690
      %v692 = vpop.f32.mrb[0].mxu0
      %693 = vmatprep.mubr.f32.mxu0 0.0
      %694 = vmatmul.mubr.f32.gmra.mrb[0].mxu0 %v622
      %v695 = vpop.f32.mrb[0].mxu0
      %v696 = vadd.f32 %v616, %v695
      %v697 = vpop.f32.mrb[0].mxu0
      %698 = vdwg.mxu0
      %v699 = vld [vmem:[%s7] sm:$0xff]
      %v700 = vld [vmem:[%s7 + $0x8] sm:$0xff]
      %v701 = vld [vmem:[%s7 + $0x10] sm:$0xff]
      %v702 = vld [vmem:[%s7 + $0x18] sm:$0xff]
      %v703 = vld [vmem:[%s8] sm:$0x1]
      %v705 = vlaneseq
      %v706 = vshrl.u32 %v705, 7
      %v707 = vsub.s32 0, %v706
      %v708 = vrot.slane %v703, %v707
      %v711 = vsel %vm477, %v464, 0
      %v714 = vsel %vm477, %v465, 0
      %716 = vmatprep.subr.mxu0 0.0
      %717 = vmatpush1.msra.mxu0 %v699
      %718 = vmatprep.subr.mxu0 0.0
      %719 = vmatpush1.msra.mxu0 %v700
      %720 = vmatprep.subr.mxu0 0.0
      %721 = vmatpush1.msra.mxu0 %v701
      %722 = vmatprep.subr.mxu0 0.0
      %723 = vmatpush1.msra.mxu0 %v702
      %724 = vmatprep.subr.mxu0 0.0
      %725 = vmatpush1.msra.mxu0 0.0
      %726 = vmatprep.subr.mxu0 0.0
      %727 = vmatpush1.msra.mxu0 0.0
      %728 = vmatprep.subr.mxu0 0.0
      %729 = vmatpush1.msra.mxu0 0.0
      %730 = vmatprep.subr.mxu0 0.0
      %731 = vmatpush1.msra.mxu0 0.0
      %732 = vmatprep.subr.mxu0 0.0
      %733 = vmatpush1.msra.mxu0 0.0
      %734 = vmatprep.subr.mxu0 0.0
      %735 = vmatpush1.msra.mxu0 0.0
      %736 = vmatprep.subr.mxu0 0.0
      %737 = vmatpush1.msra.mxu0 0.0
      %738 = vmatprep.subr.mxu0 0.0
      %739 = vmatpush1.msra.mxu0 0.0
      %740 = vmatprep.subr.mxu0 0.0
      %741 = vmatpush1.msra.mxu0 0.0
      %742 = vmatprep.subr.mxu0 0.0
      %743 = vmatpush1.msra.mxu0 0.0
      %744 = vmatprep.subr.mxu0 0.0
      %745 = vmatpush1.msra.mxu0 0.0
      %746 = vmatprep.subr.mxu0 0.0
      %747 = vmatpush1.msra.mxu0 0.0
      %748 = vmatprep.subr.mxu0 0.0
      %749 = vmatpush1.msra.mxu0 0.0
      %750 = vmatprep.subr.mxu0 0.0
      %751 = vmatpush1.msra.mxu0 0.0
      %752 = vmatprep.subr.mxu0 0.0
      %753 = vmatpush1.msra.mxu0 0.0
      %754 = vmatprep.subr.mxu0 0.0
      %755 = vmatpush1.msra.mxu0 0.0
      %756 = vmatprep.subr.mxu0 0.0
      %757 = vmatpush1.msra.mxu0 0.0
      %758 = vmatprep.subr.mxu0 0.0
      %759 = vmatpush1.msra.mxu0 0.0
      %760 = vmatprep.subr.mxu0 0.0
      %761 = vmatpush1.msra.mxu0 0.0
      %762 = vmatprep.subr.mxu0 0.0
      %763 = vmatpush1.msra.mxu0 0.0
      %764 = vmatprep.subr.mxu0 0.0
      %765 = vmatpush1.msra.mxu0 0.0
      %766 = vmatprep.subr.mxu0 0.0
      %767 = vmatpush1.msra.mxu0 0.0
      %768 = vmatprep.subr.mxu0 0.0
      %769 = vmatpush1.msra.mxu0 0.0
      %770 = vmatprep.subr.mxu0 0.0
      %771 = vmatpush1.msra.mxu0 0.0
      %772 = vmatprep.subr.mxu0 0.0
      %773 = vmatpush1.msra.mxu0 0.0
      %774 = vmatprep.subr.mxu0 0.0
      %775 = vmatpush1.msra.mxu0 0.0
      %776 = vmatprep.subr.mxu0 0.0
      %777 = vmatpush1.msra.mxu0 0.0
      %778 = vmatprep.subr.mxu0 0.0
      %779 = vmatpush1.msra.mxu0 0.0
      %780 = vmatprep.mubr.f32.mxu0 0.0
      %781 = vmatmul.mubr.f32.gmra.mrb[0].mxu0 %v711
      %v782 = vpop.f32.mrb[0].mxu0
      %v783 = vadd.f32 %v708, %v782
      %v784 = vpop.f32.mrb[0].mxu0
      %785 = vmatprep.mubr.f32.mxu0 0.0
      %786 = vmatmul.mubr.f32.gmra.mrb[0].mxu0 %v714
      %v787 = vpop.f32.mrb[0].mxu0
      %v788 = vadd.f32 %v708, %v787
      %v789 = vpop.f32.mrb[0].mxu0
      %790 = vdwg.mxu0
      %v791 = vld [vmem:[%s9] sm:$0xff]
      %v792 = vld [vmem:[%s9 + $0x8] sm:$0xff]
      %v793 = vld [vmem:[%s9 + $0x10] sm:$0xff]
      %v794 = vld [vmem:[%s9 + $0x18] sm:$0xff]
      %v795 = vld [vmem:[%s9 + $0x20] sm:$0xff]
      %v796 = vld [vmem:[%s9 + $0x28] sm:$0xff]
      %v797 = vld [vmem:[%s9 + $0x30] sm:$0xff]
      %v798 = vld [vmem:[%s9 + $0x38] sm:$0xff]
      %v799 = vld [vmem:[%s9 + $0x40] sm:$0xff]
      %v800 = vld [vmem:[%s9 + $0x48] sm:$0xff]
      %v801 = vld [vmem:[%s9 + $0x50] sm:$0xff]
      %v802 = vld [vmem:[%s9 + $0x58] sm:$0xff]
      %v803 = vld [vmem:[%s9 + $0x60] sm:$0xff]
      %v804 = vld [vmem:[%s9 + $0x68] sm:$0xff]
      %v805 = vld [vmem:[%s9 + $0x70] sm:$0xff]
      %v806 = vld [vmem:[%s9 + $0x78] sm:$0xff]
      %v807 = vmul.f32 %v691, %v791
      %v808 = vmul.f32 %v696, %v792
      %v809 = vmul.f32 %v691, %v793
      %v810 = vmul.f32 %v696, %v794
      %v811 = vmul.f32 %v691, %v795
      %v812 = vmul.f32 %v696, %v796
      %v813 = vmul.f32 %v691, %v797
      %v814 = vmul.f32 %v696, %v798
      %v815 = vmul.f32 %v691, %v799
      %v816 = vmul.f32 %v696, %v800
      %v817 = vmul.f32 %v691, %v801
      %v818 = vmul.f32 %v696, %v802
      %v819 = vmul.f32 %v691, %v803
      %v820 = vmul.f32 %v696, %v804
      %v821 = vmul.f32 %v691, %v805
      %v822 = vmul.f32 %v696, %v806
      %v823 = vmul.f32 %v783, %v791
      %v824 = vmul.f32 %v788, %v792
      %v825 = vmul.f32 %v783, %v793
      %v826 = vmul.f32 %v788, %v794
      %v827 = vmul.f32 %v783, %v795
      %v828 = vmul.f32 %v788, %v796
      %v829 = vmul.f32 %v783, %v797
      %v830 = vmul.f32 %v788, %v798
      %v831 = vmul.f32 %v783, %v799
      %v832 = vmul.f32 %v788, %v800
      %v833 = vmul.f32 %v783, %v801
      %v834 = vmul.f32 %v788, %v802
      %v835 = vmul.f32 %v783, %v803
      %v836 = vmul.f32 %v788, %v804
      %v837 = vmul.f32 %v783, %v805
      %v838 = vmul.f32 %v788, %v806
      %v840 = vsel %vm477, %v569, 0
      %v843 = vsel %vm477, %v574, 0
      %v846 = vsel %vm477, %v579, 0
      %v849 = vsel %vm477, %v584, 0
      %v852 = vsel %vm477, %v589, 0
      %v855 = vsel %vm477, %v594, 0
      %v858 = vsel %vm477, %v599, 0
      %v861 = vsel %vm477, %v604, 0
      %v864 = vsel %vm477, %v807, 0
      %v867 = vsel %vm477, %v808, 0
      %v870 = vsel %vm477, %v809, 0
      %v873 = vsel %vm477, %v810, 0
      %v876 = vsel %vm477, %v811, 0
      %v879 = vsel %vm477, %v812, 0
      %v882 = vsel %vm477, %v813, 0
      %v885 = vsel %vm477, %v814, 0
      %v888 = vsel %vm477, %v815, 0
      %v891 = vsel %vm477, %v816, 0
      %v894 = vsel %vm477, %v817, 0
      %v897 = vsel %vm477, %v818, 0
      %v900 = vsel %vm477, %v819, 0
      %v903 = vsel %vm477, %v820, 0
      %v906 = vsel %vm477, %v821, 0
      %v909 = vsel %vm477, %v822, 0
      %911 = vmatprep.subr.mxu0 0.0
      %912 = vmatpush1.xpose.msra.mxu0 %v864
      %913 = vmatprep.subr.mxu0 0.0
      %914 = vmatpush1.xpose.msra.mxu0 %v867
      %915 = vmatprep.subr.mxu0 0.0
      %916 = vmatpush1.xpose.msra.mxu0 %v870
      %917 = vmatprep.subr.mxu0 0.0
      %918 = vmatpush1.xpose.msra.mxu0 %v873
      %919 = vmatprep.subr.mxu0 0.0
      %920 = vmatpush1.xpose.msra.mxu0 %v876
      %921 = vmatprep.subr.mxu0 0.0
      %922 = vmatpush1.xpose.msra.mxu0 %v879
      %923 = vmatprep.subr.mxu0 0.0
      %924 = vmatpush1.xpose.msra.mxu0 %v882
      %925 = vmatprep.subr.mxu0 0.0
      %926 = vmatpush1.xpose.msra.mxu0 %v885
      %927 = vmatprep.subr.mxu0 0.0
      %928 = vmatpush1.xpose.msra.mxu0 %v888
      %929 = vmatprep.subr.mxu0 0.0
      %930 = vmatpush1.xpose.msra.mxu0 %v891
      %931 = vmatprep.subr.mxu0 0.0
      %932 = vmatpush1.xpose.msra.mxu0 %v894
      %933 = vmatprep.subr.mxu0 0.0
      %934 = vmatpush1.xpose.msra.mxu0 %v897
      %935 = vmatprep.subr.mxu0 0.0
      %936 = vmatpush1.xpose.msra.mxu0 %v900
      %937 = vmatprep.subr.mxu0 0.0
      %938 = vmatpush1.xpose.msra.mxu0 %v903
      %939 = vmatprep.subr.mxu0 0.0
      %940 = vmatpush1.xpose.msra.mxu0 %v906
      %941 = vmatprep.subr.mxu0 0.0
      %942 = vmatpush1.xpose.msra.mxu0 %v909
      %943 = vmatprep.subr.mxu0 0.0
      %944 = vmatpush1.xpose.msra.mxu0 0.0
      %945 = vmatprep.subr.mxu0 0.0
      %946 = vmatpush1.xpose.msra.mxu0 0.0
      %947 = vmatprep.subr.mxu0 0.0
      %948 = vmatpush1.xpose.msra.mxu0 0.0
      %949 = vmatprep.subr.mxu0 0.0
      %950 = vmatpush1.xpose.msra.mxu0 0.0
      %951 = vmatprep.subr.mxu0 0.0
      %952 = vmatpush1.xpose.msra.mxu0 0.0
      %953 = vmatprep.subr.mxu0 0.0
      %954 = vmatpush1.xpose.msra.mxu0 0.0
      %955 = vmatprep.subr.mxu0 0.0
      %956 = vmatpush1.xpose.msra.mxu0 0.0
      %957 = vmatprep.subr.mxu0 0.0
      %958 = vmatpush1.xpose.msra.mxu0 0.0
      %959 = vmatprep.subr.mxu0 0.0
      %960 = vmatpush1.xpose.msra.mxu0 0.0
      %961 = vmatprep.subr.mxu0 0.0
      %962 = vmatpush1.xpose.msra.mxu0 0.0
      %963 = vmatprep.subr.mxu0 0.0
      %964 = vmatpush1.xpose.msra.mxu0 0.0
      %965 = vmatprep.subr.mxu0 0.0
      %966 = vmatpush1.xpose.msra.mxu0 0.0
      %967 = vmatprep.subr.mxu0 0.0
      %968 = vmatpush1.xpose.msra.mxu0 0.0
      %969 = vmatprep.subr.mxu0 0.0
      %970 = vmatpush1.xpose.msra.mxu0 0.0
      %971 = vmatprep.subr.mxu0 0.0
      %972 = vmatpush1.xpose.msra.mxu0 0.0
      %973 = vmatprep.subr.mxu0 0.0
      %974 = vmatpush1.xpose.msra.mxu0 0.0
      %975 = vmatprep.mubr.f32.mxu0 0.0
      %976 = vmatmul.mubr.f32.gmra.mrb[0].mxu0 %v840
      %v977 = vpop.f32.mrb[0].mxu0
      %v978 = vadd.f32 0.0, %v977
      %v979 = vpop.f32.mrb[0].mxu0
      %980 = vmatprep.mubr.f32.mxu0 0.0
      %981 = vmatmul.mubr.f32.gmra.mrb[0].mxu0 %v843
      %v982 = vpop.f32.mrb[0].mxu0
      %v983 = vadd.f32 0.0, %v982
      %v984 = vpop.f32.mrb[0].mxu0
      %985 = vmatprep.mubr.f32.mxu0 0.0
      %986 = vmatmul.mubr.f32.gmra.mrb[0].mxu0 %v846
      %v987 = vpop.f32.mrb[0].mxu0
      %v988 = vadd.f32 0.0, %v987
      %v989 = vpop.f32.mrb[0].mxu0
      %990 = vmatprep.mubr.f32.mxu0 0.0
      %991 = vmatmul.mubr.f32.gmra.mrb[0].mxu0 %v849
      %v992 = vpop.f32.mrb[0].mxu0
      %v993 = vadd.f32 0.0, %v992
      %v994 = vpop.f32.mrb[0].mxu0
      %995 = vmatprep.mubr.f32.mxu0 0.0
      %996 = vmatmul.mubr.f32.gmra.mrb[0].mxu0 %v852
      %v997 = vpop.f32.mrb[0].mxu0
      %v998 = vadd.f32 0.0, %v997
      %v999 = vpop.f32.mrb[0].mxu0
      %1000 = vmatprep.mubr.f32.mxu0 0.0
      %1001 = vmatmul.mubr.f32.gmra.mrb[0].mxu0 %v855
      %v1002 = vpop.f32.mrb[0].mxu0
      %v1003 = vadd.f32 0.0, %v1002
      %v1004 = vpop.f32.mrb[0].mxu0
      %1005 = vmatprep.mubr.f32.mxu0 0.0
      %1006 = vmatmul.mubr.f32.gmra.mrb[0].mxu0 %v858
      %v1007 = vpop.f32.mrb[0].mxu0
      %v1008 = vadd.f32 0.0, %v1007
      %v1009 = vpop.f32.mrb[0].mxu0
      %1010 = vmatprep.mubr.f32.mxu0 0.0
      %1011 = vmatmul.mubr.f32.gmra.mrb[0].mxu0 %v861
      %v1012 = vpop.f32.mrb[0].mxu0
      %v1013 = vadd.f32 0.0, %v1012
      %v1014 = vpop.f32.mrb[0].mxu0
      %1015 = vdwg.mxu0
      %1016 = vmax.xlane.f32.xlu0 %v978
      %v1017 = vpop.xlane.xlu0 %1016
      %1018 = vmax.xlane.f32.xlu0 %v983
      %v1019 = vpop.xlane.xlu0 %1018
      %1020 = vmax.xlane.f32.xlu0 %v988
      %v1021 = vpop.xlane.xlu0 %1020
      %1022 = vmax.xlane.f32.xlu0 %v993
      %v1023 = vpop.xlane.xlu0 %1022
      %1024 = vmax.xlane.f32.xlu0 %v998
      %v1025 = vpop.xlane.xlu0 %1024
      %1026 = vmax.xlane.f32.xlu0 %v1003
      %v1027 = vpop.xlane.xlu0 %1026
      %1028 = vmax.xlane.f32.xlu0 %v1008
      %v1029 = vpop.xlane.xlu0 %1028
      %1030 = vmax.xlane.f32.xlu0 %v1013
      %v1031 = vpop.xlane.xlu0 %1030
      %v1032 = vsub.f32 %v978, %v1017
      %v1033 = vsub.f32 %v983, %v1019
      %v1034 = vsub.f32 %v988, %v1021
      %v1035 = vsub.f32 %v993, %v1023
      %v1036 = vsub.f32 %v998, %v1025
      %v1037 = vsub.f32 %v1003, %v1027
      %v1038 = vsub.f32 %v1008, %v1029
      %v1039 = vsub.f32 %v1013, %v1031
      %v1040 = vmul.f32 %v1032, 1.442695
      %v1041 = vpow.pop %v1040
      %v1042 = vmul.f32 %v1033, 1.442695
      %v1043 = vpow.pop %v1042
      %v1044 = vmul.f32 %v1034, 1.442695
      %v1045 = vpow.pop %v1044
      %v1046 = vmul.f32 %v1035, 1.442695
      %v1047 = vpow.pop %v1046
      %v1048 = vmul.f32 %v1036, 1.442695
      %v1049 = vpow.pop %v1048
      %v1050 = vmul.f32 %v1037, 1.442695
      %v1051 = vpow.pop %v1050
      %v1052 = vmul.f32 %v1038, 1.442695
      %v1053 = vpow.pop %v1052
      %v1054 = vmul.f32 %v1039, 1.442695
      %v1055 = vpow.pop %v1054
      %1056 = vmatprep.subr.mxu0 0.0
      %1057 = vmatpush1.msra.mxu0 %v791
      %1058 = vmatprep.subr.mxu0 0.0
      %1059 = vmatpush1.msra.mxu0 %v792
      %1060 = vmatprep.subr.mxu0 0.0
      %1061 = vmatpush1.msra.mxu0 %v793
      %1062 = vmatprep.subr.mxu0 0.0
      %1063 = vmatpush1.msra.mxu0 %v794
      %1064 = vmatprep.subr.mxu0 0.0
      %1065 = vmatpush1.msra.mxu0 %v795
      %1066 = vmatprep.subr.mxu0 0.0
      %1067 = vmatpush1.msra.mxu0 %v796
      %1068 = vmatprep.subr.mxu0 0.0
      %1069 = vmatpush1.msra.mxu0 %v797
      %1070 = vmatprep.subr.mxu0 0.0
      %1071 = vmatpush1.msra.mxu0 %v798
      %1072 = vmatprep.subr.mxu0 0.0
      %1073 = vmatpush1.msra.mxu0 %v799
      %1074 = vmatprep.subr.mxu0 0.0
      %1075 = vmatpush1.msra.mxu0 %v800
      %1076 = vmatprep.subr.mxu0 0.0
      %1077 = vmatpush1.msra.mxu0 %v801
      %1078 = vmatprep.subr.mxu0 0.0
      %1079 = vmatpush1.msra.mxu0 %v802
      %1080 = vmatprep.subr.mxu0 0.0
      %1081 = vmatpush1.msra.mxu0 %v803
      %1082 = vmatprep.subr.mxu0 0.0
      %1083 = vmatpush1.msra.mxu0 %v804
      %1084 = vmatprep.subr.mxu0 0.0
      %1085 = vmatpush1.msra.mxu0 %v805
      %1086 = vmatprep.subr.mxu0 0.0
      %1087 = vmatpush1.msra.mxu0 %v806
      %1088 = vmatprep.subr.mxu0 0.0
      %1089 = vmatpush1.msra.mxu0 0.0
      %1090 = vmatprep.subr.mxu0 0.0
      %1091 = vmatpush1.msra.mxu0 0.0
      %1092 = vmatprep.subr.mxu0 0.0
      %1093 = vmatpush1.msra.mxu0 0.0
      %1094 = vmatprep.subr.mxu0 0.0
      %1095 = vmatpush1.msra.mxu0 0.0
      %1096 = vmatprep.subr.mxu0 0.0
      %1097 = vmatpush1.msra.mxu0 0.0
      %1098 = vmatprep.subr.mxu0 0.0
      %1099 = vmatpush1.msra.mxu0 0.0
      %1100 = vmatprep.subr.mxu0 0.0
      %1101 = vmatpush1.msra.mxu0 0.0
      %1102 = vmatprep.subr.mxu0 0.0
      %1103 = vmatpush1.msra.mxu0 0.0
      %1104 = vmatprep.subr.mxu0 0.0
      %1105 = vmatpush1.msra.mxu0 0.0
      %1106 = vmatprep.subr.mxu0 0.0
      %1107 = vmatpush1.msra.mxu0 0.0
      %1108 = vmatprep.subr.mxu0 0.0
      %1109 = vmatpush1.msra.mxu0 0.0
      %1110 = vmatprep.subr.mxu0 0.0
      %1111 = vmatpush1.msra.mxu0 0.0
      %1112 = vmatprep.subr.mxu0 0.0
      %1113 = vmatpush1.msra.mxu0 0.0
      %1114 = vmatprep.subr.mxu0 0.0
      %1115 = vmatpush1.msra.mxu0 0.0
      %1116 = vmatprep.subr.mxu0 0.0
      %1117 = vmatpush1.msra.mxu0 0.0
      %1118 = vmatprep.subr.mxu0 0.0
      %1119 = vmatpush1.msra.mxu0 0.0
      %1120 = vmatprep.mubr.f32.mxu0 0.0
      %1121 = vmatmul.mubr.f32.gmra.mrb[0].mxu0 %v1041
      %v1122 = vpop.f32.mrb[0].mxu0
      %v1123 = vadd.f32 0.0, %v1122
      %v1124 = vpop.f32.mrb[0].mxu0
      %1125 = vmatprep.mubr.f32.mxu0 0.0
      %1126 = vmatmul.mubr.f32.gmra.mrb[0].mxu0 %v1043
      %v1127 = vpop.f32.mrb[0].mxu0
      %v1128 = vadd.f32 0.0, %v1127
      %v1129 = vpop.f32.mrb[0].mxu0
      %1130 = vmatprep.mubr.f32.mxu0 0.0
      %1131 = vmatmul.mubr.f32.gmra.mrb[0].mxu0 %v1045
      %v1132 = vpop.f32.mrb[0].mxu0
      %v1133 = vadd.f32 0.0, %v1132
      %v1134 = vpop.f32.mrb[0].mxu0
      %1135 = vmatprep.mubr.f32.mxu0 0.0
      %1136 = vmatmul.mubr.f32.gmra.mrb[0].mxu0 %v1047
      %v1137 = vpop.f32.mrb[0].mxu0
      %v1138 = vadd.f32 0.0, %v1137
      %v1139 = vpop.f32.mrb[0].mxu0
      %1140 = vmatprep.mubr.f32.mxu0 0.0
      %1141 = vmatmul.mubr.f32.gmra.mrb[0].mxu0 %v1049
      %v1142 = vpop.f32.mrb[0].mxu0
      %v1143 = vadd.f32 0.0, %v1142
      %v1144 = vpop.f32.mrb[0].mxu0
      %1145 = vmatprep.mubr.f32.mxu0 0.0
      %1146 = vmatmul.mubr.f32.gmra.mrb[0].mxu0 %v1051
      %v1147 = vpop.f32.mrb[0].mxu0
      %v1148 = vadd.f32 0.0, %v1147
      %v1149 = vpop.f32.mrb[0].mxu0
      %1150 = vmatprep.mubr.f32.mxu0 0.0
      %1151 = vmatmul.mubr.f32.gmra.mrb[0].mxu0 %v1053
      %v1152 = vpop.f32.mrb[0].mxu0
      %v1153 = vadd.f32 0.0, %v1152
      %v1154 = vpop.f32.mrb[0].mxu0
      %1155 = vmatprep.mubr.f32.mxu0 0.0
      %1156 = vmatmul.mubr.f32.gmra.mrb[0].mxu0 %v1055
      %v1157 = vpop.f32.mrb[0].mxu0
      %v1158 = vadd.f32 0.0, %v1157
      %v1159 = vpop.f32.mrb[0].mxu0
      %1160 = vdwg.mxu0
      %1161 = vmatprep.subr.mxu0 0.0
      %1162 = vmatpush1.msra.mxu0 %v823
      %1163 = vmatprep.subr.mxu0 0.0
      %1164 = vmatpush1.msra.mxu0 %v824
      %1165 = vmatprep.subr.mxu0 0.0
      %1166 = vmatpush1.msra.mxu0 %v825
      %1167 = vmatprep.subr.mxu0 0.0
      %1168 = vmatpush1.msra.mxu0 %v826
      %1169 = vmatprep.subr.mxu0 0.0
      %1170 = vmatpush1.msra.mxu0 %v827
      %1171 = vmatprep.subr.mxu0 0.0
      %1172 = vmatpush1.msra.mxu0 %v828
      %1173 = vmatprep.subr.mxu0 0.0
      %1174 = vmatpush1.msra.mxu0 %v829
      %1175 = vmatprep.subr.mxu0 0.0
      %1176 = vmatpush1.msra.mxu0 %v830
      %1177 = vmatprep.subr.mxu0 0.0
      %1178 = vmatpush1.msra.mxu0 %v831
      %1179 = vmatprep.subr.mxu0 0.0
      %1180 = vmatpush1.msra.mxu0 %v832
      %1181 = vmatprep.subr.mxu0 0.0
      %1182 = vmatpush1.msra.mxu0 %v833
      %1183 = vmatprep.subr.mxu0 0.0
      %1184 = vmatpush1.msra.mxu0 %v834
      %1185 = vmatprep.subr.mxu0 0.0
      %1186 = vmatpush1.msra.mxu0 %v835
      %1187 = vmatprep.subr.mxu0 0.0
      %1188 = vmatpush1.msra.mxu0 %v836
      %1189 = vmatprep.subr.mxu0 0.0
      %1190 = vmatpush1.msra.mxu0 %v837
      %1191 = vmatprep.subr.mxu0 0.0
      %1192 = vmatpush1.msra.mxu0 %v838
      %1193 = vmatprep.subr.mxu0 0.0
      %1194 = vmatpush1.msra.mxu0 0.0
      %1195 = vmatprep.subr.mxu0 0.0
      %1196 = vmatpush1.msra.mxu0 0.0
      %1197 = vmatprep.subr.mxu0 0.0
      %1198 = vmatpush1.msra.mxu0 0.0
      %1199 = vmatprep.subr.mxu0 0.0
      %1200 = vmatpush1.msra.mxu0 0.0
      %1201 = vmatprep.subr.mxu0 0.0
      %1202 = vmatpush1.msra.mxu0 0.0
      %1203 = vmatprep.subr.mxu0 0.0
      %1204 = vmatpush1.msra.mxu0 0.0
      %1205 = vmatprep.subr.mxu0 0.0
      %1206 = vmatpush1.msra.mxu0 0.0
      %1207 = vmatprep.subr.mxu0 0.0
      %1208 = vmatpush1.msra.mxu0 0.0
      %1209 = vmatprep.subr.mxu0 0.0
      %1210 = vmatpush1.msra.mxu0 0.0
      %1211 = vmatprep.subr.mxu0 0.0
      %1212 = vmatpush1.msra.mxu0 0.0
      %1213 = vmatprep.subr.mxu0 0.0
      %1214 = vmatpush1.msra.mxu0 0.0
      %1215 = vmatprep.subr.mxu0 0.0
      %1216 = vmatpush1.msra.mxu0 0.0
      %1217 = vmatprep.subr.mxu0 0.0
      %1218 = vmatpush1.msra.mxu0 0.0
      %1219 = vmatprep.subr.mxu0 0.0
      %1220 = vmatpush1.msra.mxu0 0.0
      %1221 = vmatprep.subr.mxu0 0.0
      %1222 = vmatpush1.msra.mxu0 0.0
      %1223 = vmatprep.subr.mxu0 0.0
      %1224 = vmatpush1.msra.mxu0 0.0
      %1225 = vmatprep.mubr.f32.mxu0 0.0
      %1226 = vmatmul.mubr.f32.gmra.mrb[0].mxu0 %v1041
      %v1227 = vpop.f32.mrb[0].mxu0
      %v1228 = vadd.f32 0.0, %v1227
      %v1229 = vpop.f32.mrb[0].mxu0
      %1230 = vmatprep.mubr.f32.mxu0 0.0
      %1231 = vmatmul.mubr.f32.gmra.mrb[0].mxu0 %v1043
      %v1232 = vpop.f32.mrb[0].mxu0
      %v1233 = vadd.f32 0.0, %v1232
      %v1234 = vpop.f32.mrb[0].mxu0
      %1235 = vmatprep.mubr.f32.mxu0 0.0
      %1236 = vmatmul.mubr.f32.gmra.mrb[0].mxu0 %v1045
      %v1237 = vpop.f32.mrb[0].mxu0
      %v1238 = vadd.f32 0.0, %v1237
      %v1239 = vpop.f32.mrb[0].mxu0
      %1240 = vmatprep.mubr.f32.mxu0 0.0
      %1241 = vmatmul.mubr.f32.gmra.mrb[0].mxu0 %v1047
      %v1242 = vpop.f32.mrb[0].mxu0
      %v1243 = vadd.f32 0.0, %v1242
      %v1244 = vpop.f32.mrb[0].mxu0
      %1245 = vmatprep.mubr.f32.mxu0 0.0
      %1246 = vmatmul.mubr.f32.gmra.mrb[0].mxu0 %v1049
      %v1247 = vpop.f32.mrb[0].mxu0
      %v1248 = vadd.f32 0.0, %v1247
      %v1249 = vpop.f32.mrb[0].mxu0
      %1250 = vmatprep.mubr.f32.mxu0 0.0
      %1251 = vmatmul.mubr.f32.gmra.mrb[0].mxu0 %v1051
      %v1252 = vpop.f32.mrb[0].mxu0
      %v1253 = vadd.f32 0.0, %v1252
      %v1254 = vpop.f32.mrb[0].mxu0
      %1255 = vmatprep.mubr.f32.mxu0 0.0
      %1256 = vmatmul.mubr.f32.gmra.mrb[0].mxu0 %v1053
      %v1257 = vpop.f32.mrb[0].mxu0
      %v1258 = vadd.f32 0.0, %v1257
      %v1259 = vpop.f32.mrb[0].mxu0
      %1260 = vmatprep.mubr.f32.mxu0 0.0
      %1261 = vmatmul.mubr.f32.gmra.mrb[0].mxu0 %v1055
      %v1262 = vpop.f32.mrb[0].mxu0
      %v1263 = vadd.f32 0.0, %v1262
      %v1264 = vpop.f32.mrb[0].mxu0
      %1265 = vdwg.mxu0
      %v1266 = vrcp.pop %v1123
      %v1267 = vmul.f32 %v1228, %v1266
      %v1268 = vrcp.pop %v1128
      %v1269 = vmul.f32 %v1233, %v1268
      %v1270 = vrcp.pop %v1133
      %v1271 = vmul.f32 %v1238, %v1270
      %v1272 = vrcp.pop %v1138
      %v1273 = vmul.f32 %v1243, %v1272
      %v1274 = vrcp.pop %v1143
      %v1275 = vmul.f32 %v1248, %v1274
      %v1276 = vrcp.pop %v1148
      %v1277 = vmul.f32 %v1253, %v1276
      %v1278 = vrcp.pop %v1153
      %v1279 = vmul.f32 %v1258, %v1278
      %v1280 = vrcp.pop %v1158
      %v1281 = vmul.f32 %v1263, %v1280
      %v1282 = vld [vmem:[%s10] sm:$0xff]
      %v1283 = vld [vmem:[%s10 + $0x8] sm:$0xff]
      %v1284 = vld [vmem:[%s10 + $0x10] sm:$0xff]
      %v1285 = vld [vmem:[%s10 + $0x18] sm:$0xff]
      %v1286 = vld [vmem:[%s11] sm:$0x1]
      %v1288 = vlaneseq
      %v1289 = vshrl.u32 %v1288, 7
      %v1290 = vsub.s32 0, %v1289
      %v1291 = vrot.slane %v1286, %v1290
      %v1294 = vsel %vm477, %v1267, 0
      %v1297 = vsel %vm477, %v1269, 0
      %v1300 = vsel %vm477, %v1271, 0
      %v1303 = vsel %vm477, %v1273, 0
      %v1306 = vsel %vm477, %v1275, 0
      %v1309 = vsel %vm477, %v1277, 0
      %v1312 = vsel %vm477, %v1279, 0
      %v1315 = vsel %vm477, %v1281, 0
      %1317 = vmatprep.subr.mxu0 0.0
      %1318 = vmatpush1.msra.mxu0 %v1282
      %1319 = vmatprep.subr.mxu0 0.0
      %1320 = vmatpush1.msra.mxu0 %v1283
      %1321 = vmatprep.subr.mxu0 0.0
      %1322 = vmatpush1.msra.mxu0 %v1284
      %1323 = vmatprep.subr.mxu0 0.0
      %1324 = vmatpush1.msra.mxu0 %v1285
      %1325 = vmatprep.subr.mxu0 0.0
      %1326 = vmatpush1.msra.mxu0 0.0
      %1327 = vmatprep.subr.mxu0 0.0
      %1328 = vmatpush1.msra.mxu0 0.0
      %1329 = vmatprep.subr.mxu0 0.0
      %1330 = vmatpush1.msra.mxu0 0.0
      %1331 = vmatprep.subr.mxu0 0.0
      %1332 = vmatpush1.msra.mxu0 0.0
      %1333 = vmatprep.subr.mxu0 0.0
      %1334 = vmatpush1.msra.mxu0 0.0
      %1335 = vmatprep.subr.mxu0 0.0
      %1336 = vmatpush1.msra.mxu0 0.0
      %1337 = vmatprep.subr.mxu0 0.0
      %1338 = vmatpush1.msra.mxu0 0.0
      %1339 = vmatprep.subr.mxu0 0.0
      %1340 = vmatpush1.msra.mxu0 0.0
      %1341 = vmatprep.subr.mxu0 0.0
      %1342 = vmatpush1.msra.mxu0 0.0
      %1343 = vmatprep.subr.mxu0 0.0
      %1344 = vmatpush1.msra.mxu0 0.0
      %1345 = vmatprep.subr.mxu0 0.0
      %1346 = vmatpush1.msra.mxu0 0.0
      %1347 = vmatprep.subr.mxu0 0.0
      %1348 = vmatpush1.msra.mxu0 0.0
      %1349 = vmatprep.subr.mxu0 0.0
      %1350 = vmatpush1.msra.mxu0 0.0
      %1351 = vmatprep.subr.mxu0 0.0
      %1352 = vmatpush1.msra.mxu0 0.0
      %1353 = vmatprep.subr.mxu0 0.0
      %1354 = vmatpush1.msra.mxu0 0.0
      %1355 = vmatprep.subr.mxu0 0.0
      %1356 = vmatpush1.msra.mxu0 0.0
      %1357 = vmatprep.subr.mxu0 0.0
      %1358 = vmatpush1.msra.mxu0 0.0
      %1359 = vmatprep.subr.mxu0 0.0
      %1360 = vmatpush1.msra.mxu0 0.0
      %1361 = vmatprep.subr.mxu0 0.0
      %1362 = vmatpush1.msra.mxu0 0.0
      %1363 = vmatprep.subr.mxu0 0.0
      %1364 = vmatpush1.msra.mxu0 0.0
      %1365 = vmatprep.subr.mxu0 0.0
      %1366 = vmatpush1.msra.mxu0 0.0
      %1367 = vmatprep.subr.mxu0 0.0
      %1368 = vmatpush1.msra.mxu0 0.0
      %1369 = vmatprep.subr.mxu0 0.0
      %1370 = vmatpush1.msra.mxu0 0.0
      %1371 = vmatprep.subr.mxu0 0.0
      %1372 = vmatpush1.msra.mxu0 0.0
      %1373 = vmatprep.subr.mxu0 0.0
      %1374 = vmatpush1.msra.mxu0 0.0
      %1375 = vmatprep.subr.mxu0 0.0
      %1376 = vmatpush1.msra.mxu0 0.0
      %1377 = vmatprep.subr.mxu0 0.0
      %1378 = vmatpush1.msra.mxu0 0.0
      %1379 = vmatprep.subr.mxu0 0.0
      %1380 = vmatpush1.msra.mxu0 0.0
      %1381 = vmatprep.mubr.f32.mxu0 0.0
      %1382 = vmatmul.mubr.f32.gmra.mrb[0].mxu0 %v1294
      %v1383 = vpop.f32.mrb[0].mxu0
      %v1384 = vadd.f32 %v1291, %v1383
      %v1385 = vpop.f32.mrb[0].mxu0
      %1386 = vmatprep.mubr.f32.mxu0 0.0
      %1387 = vmatmul.mubr.f32.gmra.mrb[0].mxu0 %v1297
      %v1388 = vpop.f32.mrb[0].mxu0
      %v1389 = vadd.f32 %v1291, %v1388
      %v1390 = vpop.f32.mrb[0].mxu0
      %1391 = vmatprep.mubr.f32.mxu0 0.0
      %1392 = vmatmul.mubr.f32.gmra.mrb[0].mxu0 %v1300
      %v1393 = vpop.f32.mrb[0].mxu0
      %v1394 = vadd.f32 %v1291, %v1393
      %v1395 = vpop.f32.mrb[0].mxu0
      %1396 = vmatprep.mubr.f32.mxu0 0.0
      %1397 = vmatmul.mubr.f32.gmra.mrb[0].mxu0 %v1303
      %v1398 = vpop.f32.mrb[0].mxu0
      %v1399 = vadd.f32 %v1291, %v1398
      %v1400 = vpop.f32.mrb[0].mxu0
      %1401 = vmatprep.mubr.f32.mxu0 0.0
      %1402 = vmatmul.mubr.f32.gmra.mrb[0].mxu0 %v1306
      %v1403 = vpop.f32.mrb[0].mxu0
      %v1404 = vadd.f32 %v1291, %v1403
      %v1405 = vpop.f32.mrb[0].mxu0
      %1406 = vmatprep.mubr.f32.mxu0 0.0
      %1407 = vmatmul.mubr.f32.gmra.mrb[0].mxu0 %v1309
      %v1408 = vpop.f32.mrb[0].mxu0
      %v1409 = vadd.f32 %v1291, %v1408
      %v1410 = vpop.f32.mrb[0].mxu0
      %1411 = vmatprep.mubr.f32.mxu0 0.0
      %1412 = vmatmul.mubr.f32.gmra.mrb[0].mxu0 %v1312
      %v1413 = vpop.f32.mrb[0].mxu0
      %v1414 = vadd.f32 %v1291, %v1413
      %v1415 = vpop.f32.mrb[0].mxu0
      %1416 = vmatprep.mubr.f32.mxu0 0.0
      %1417 = vmatmul.mubr.f32.gmra.mrb[0].mxu0 %v1315
      %v1418 = vpop.f32.mrb[0].mxu0
      %v1419 = vadd.f32 %v1291, %v1418
      %v1420 = vpop.f32.mrb[0].mxu0
      %1421 = vdwg.mxu0
      %1422 = vst.msk [vmem:[%s453] sm:$0xff] %vm477, %v1384
      %1423 = vst.msk [vmem:[%s453 + $0x8] sm:$0xff] %vm477, %v1389
      %1424 = vst.msk [vmem:[%s453 + $0x10] sm:$0xff] %vm477, %v1394
      %1425 = vst.msk [vmem:[%s453 + $0x18] sm:$0xff] %vm477, %v1399
      %1426 = vst.msk [vmem:[%s453 + $0x20] sm:$0xff] %vm477, %v1404
      %1427 = vst.msk [vmem:[%s453 + $0x28] sm:$0xff] %vm477, %v1409
      %1428 = vst.msk [vmem:[%s453 + $0x30] sm:$0xff] %vm477, %v1414
      %1429 = vst.msk [vmem:[%s453 + $0x38] sm:$0xff] %vm477, %v1419
      %p1430 = scmp.lt.s32.totalorder %s23, 1
      %s1431 = scalar_select %p1430, %s23, 1
      %s1432 = smul.addr %s1431, 8
      %s1433 = smul.addr %s1432, 8
      %s1434 = scalar_lea.vmem %s12, %s1433
      // Predicated region
      $region69: #{attention_forward.1} parent=67 // pred_check
        %p1435 = pneg %p308
      $region70: #{attention_forward.1} parent=67 // pred_check_branch
        %1437 = sbr.rel (%p1435) target = $region72
      $region71: #{attention_forward.1} parent=67 // pred_region
        _
      $region72: #{attention_forward.1} parent=67 // pred_fallthru
        _
    $region68: #{attention_forward.1} parent=5 // pred_fallthru
      _
    %p1438 = scmp.le.s32.totalorder 2, %s18
    // Predicated region
    $region73: #{attention_forward.1} parent=5 // pred_check
      %p1439 = pneg %p1438
    $region74: #{attention_forward.1} parent=5 // pred_check_branch
      %1441 = sbr.rel (%p1439) target = $region76
    $region75: #{attention_forward.1} parent=5 // pred_region
      %s1442 = ssub.s32 %s18, 2
      // Predicated region
      $region77: #{attention_forward.1} parent=75 // pred_check
        %p1443 = pneg %p314
      $region78: #{attention_forward.1} parent=75 // pred_check_branch
        %1445 = sbr.rel (%p1443) target = $region80
      $region79: #{attention_forward.1} parent=75 // pred_region
        %p1446 = scmp.lt.s32.totalorder %s24, 1
        %s1447 = scalar_select %p1446, %s24, 1
        %s1448 = smul.addr %s1447, 8
        %s1449 = smul.addr %s1448, 8
        %s1450 = scalar_lea.vmem %s12, %s1449
      $region80: #{attention_forward.1} parent=75 // pred_fallthru
        _
    $region76: #{attention_forward.1} parent=5 // pred_fallthru
      _
  $region6: #{attention_forward.1} parent=0 // loop_footer
    %s22 = sadd.s32 1, %s18
  $region7: #{attention_forward.1} parent=0 // loop_footer_branch
    %17 = sbr.rel target = $region3
  $region8: #{attention_forward.1} parent=0 // loop_exit
    _

</llo_original>
